<compile_context>
chip_gen: v5e
topology: v5e:2x2
jax: 0.10.0
libtpu: 0.0.40
codegen_flags: <defaults>
</compile_context>

<pallas_src>
import jax
import jax.numpy as jnp
from jax import lax
from jax.experimental import pallas as pl
from jax.experimental.pallas import tpu as pltpu

W0_INITIAL = 5.0  # first-layer sine frequency (folded into w1/b1 in the wrapper)
W0_HIDDEN = 1.0   # hidden-layer sine frequency (== 1, multiply elided)

LANE = 128  # lane quantum (batch tiling)


def value_net_kernel(x_ref, w1_ref, b1_ref, w2_ref, b2_ref,
                     w3_ref, b3_ref, w4_ref, b4_ref, o_ref):
    """Whole 4-layer SIREN for one (tile_b, D_in) batch slab; activations (H, tile_b)."""
    cdt = w1_ref.dtype                     # MXU operand dtype (bf16 or f32)
    x = x_ref[...]                         # (tile_b, D_in), already in cdt

    # Layer 1: W0 is pre-folded into w1/b1.  Contract D_in of both operands
    # (A @ B^T on the MXU) -> (H, tile_b), batch on lanes.
    z = lax.dot_general(w1_ref[...], x, (((1,), (1,)), ((), ())),
                        preferred_element_type=jnp.float32) + b1_ref[...]
    h = jnp.sin(z)                         # (H, tile_b) f32

    # Layers 2 / 3: sin(W @ h + b)   (w0 == 1.0)
    z = jnp.dot(w2_ref[...], h.astype(cdt),
                preferred_element_type=jnp.float32) + b2_ref[...]
    h = jnp.sin(z)
    z = jnp.dot(w3_ref[...], h.astype(cdt),
                preferred_element_type=jnp.float32) + b3_ref[...]
    h = jnp.sin(z)

    # Final layer: identity activation, scalar bias from SMEM. Lane-dense (1, tile_b).
    v = jnp.dot(w4_ref[...], h.astype(cdt), preferred_element_type=jnp.float32)
    o_ref[...] = (v + b4_ref[0, 0]).astype(o_ref.dtype)


def value_network_forward(state, params, *, tile_b=1024, compute_dtype=jnp.bfloat16):
    """state: (B, D_in) f32.  params: PyTorch-oriented (out,in) weights, (out,1) biases.

    tile_b: batch elements per grid step (rounded to a multiple of 128, capped
    at 2048; shrunk automatically so that batches >= 256 always give >= 2 grid
    steps for v7x's two TensorCores).  compute_dtype=bf16 is the recommended
    default on all generations (v5e's MXU is bf16-native; f32 matmuls are a
    multi-pass fallback).  Returns (B, 1) f32.
    """
    B, D_in = state.shape
    H = params["w1"].shape[0]
    cdt = compute_dtype

    # ---- batch tiling --------------------------------------------------------
    req = max(LANE, (min(int(tile_b), 2048) // LANE) * LANE)   # requested, 128-multiple
    n_tiles = pl.cdiv(B, LANE)                                 # 128-wide lane tiles needed
    if n_tiles <= 1:
        tb = LANE                                              # tiny batch: single step
    else:
        # >= 2 grid steps whenever B >= 2*LANE (keeps both v7x TCs busy).
        tb = min(req, ((n_tiles + 1) // 2) * LANE)
    B_pad = pl.cdiv(B, tb) * tb
    grid = (B_pad // tb,)

    # ---- inputs: x streamed in compute dtype, natural (B, D_in) layout -------
    x = state.astype(cdt)
    if B_pad != B:
        x = jnp.pad(x, ((0, B_pad - B), (0, 0)))               # zero rows, sliced off later

    # ---- weights: W0_INITIAL folded into layer 1 ------------------------------
    w1 = (params["w1"] * W0_INITIAL).astype(cdt)               # (H, D_in)
    b1 = (params["b1"] * W0_INITIAL).astype(jnp.float32)       # (H, 1)
    w2 = params["w2"].astype(cdt)
    b2 = params["b2"].astype(jnp.float32)
    w3 = params["w3"].astype(cdt)
    b3 = params["b3"].astype(jnp.float32)
    w4 = params["w4"].astype(cdt)
    b4 = params["b4"].astype(jnp.float32)                      # (1, 1) scalar -> SMEM

    rep = lambda i: (0, 0)  # weights/biases fully resident across the grid
    in_specs = [
        pl.BlockSpec((tb, D_in), lambda i: (i, 0)),            # x, tiled over batch rows
        pl.BlockSpec((H, D_in), rep), pl.BlockSpec((H, 1), rep),
        pl.BlockSpec((H, H), rep),    pl.BlockSpec((H, 1), rep),
        pl.BlockSpec((H, H), rep),    pl.BlockSpec((H, 1), rep),
        pl.BlockSpec((1, H), rep),
        pl.BlockSpec(memory_space=pltpu.MemorySpace.SMEM),     # b4 as an SMEM scalar
    ]
    out_specs = pl.BlockSpec((1, tb), lambda i: (0, i))        # lane-dense output slab

    weight_bytes = sum(int(a.size) * a.dtype.itemsize
                       for a in (w1, b1, w2, b2, w3, b3, w4, b4))
    cost = pl.CostEstimate(
        flops=int(2 * B_pad * (D_in * H + 2 * H * H + H)),
        transcendentals=int(3 * B_pad * H),
        bytes_accessed=int(x.size) * x.dtype.itemsize + weight_bytes + int(B_pad) * 4,
    )

    out = pl.pallas_call(
        value_net_kernel,
        out_shape=jax.ShapeDtypeStruct((1, B_pad), jnp.float32),
        grid=grid,
        in_specs=in_specs,
        out_specs=out_specs,
        compiler_params=pltpu.CompilerParams(
            dimension_semantics=("parallel",)),   # grid >= 2 shards across v7x TCs
        cost_estimate=cost,
    )(x, w1, b1, w2, b2, w3, b3, w4, b4)

    return out[0, :B].reshape(B, 1)


def init_siren_params(key, input_dims, hidden, c=6.0):
    """Deterministic SIREN init, PyTorch (out, in) weight orientation."""
    ks = jax.random.split(key, 8)

    def uni(k, shape, bound):
        return jax.random.uniform(k, shape, jnp.float32, -bound, bound)

    b1 = 1.0 / input_dims
    bh = (c / hidden) ** 0.5 / W0_HIDDEN
    return {
        "w1": uni(ks[0], (hidden, input_dims), b1),
        "b1": uni(ks[1], (hidden, 1), b1),
        "w2": uni(ks[2], (hidden, hidden), bh),
        "b2": uni(ks[3], (hidden, 1), bh),
        "w3": uni(ks[4], (hidden, hidden), bh),
        "b3": uni(ks[5], (hidden, 1), bh),
        "w4": uni(ks[6], (1, hidden), bh),
        "b4": uni(ks[7], (1, 1), bh),
    }


def reference_forward(state, p):
    h = jnp.sin(W0_INITIAL * (state @ p["w1"].T + p["b1"].T))
    h = jnp.sin(h @ p["w2"].T + p["b2"].T)
    h = jnp.sin(h @ p["w3"].T + p["b3"].T)
    return h @ p["w4"].T + p["b4"].T


if __name__ == "__main__":
    D_IN, HIDDEN = 8, 32   # small synthetic shapes (fc1_dims = fc2_dims = HIDDEN)

    key = jax.random.PRNGKey(0)
    k_small, k_big, k_params = jax.random.split(key, 3)
    params = init_siren_params(k_params, D_IN, HIDDEN)

    # --- small batch: single grid step -------------------------------------
    state_s = jax.random.normal(k_small, (8, D_IN), jnp.float32)
    v_ref_s = reference_forward(state_s, params)

    # Exact f32 MXU path: tight check against the pure-JAX reference
    # (W0 folding changes rounding slightly -> 1e-4 tolerance).
    v32 = jax.block_until_ready(
        value_network_forward(state_s, params, compute_dtype=jnp.float32))
    assert v32.shape == (8, 1)
    assert jnp.allclose(v32, v_ref_s, atol=1e-4, rtol=1e-4), "f32 mismatch vs reference"

    # Default bf16-operand path (fast MXU on all generations): looser tolerance.
    v16 = jax.block_until_ready(value_network_forward(state_s, params))
    assert v16.shape == (8, 1)
    assert jnp.allclose(v16, v_ref_s, atol=5e-2, rtol=5e-2), "bf16 mismatch vs reference"

    # --- moderate batch: exercises batch padding + multi-step grid ----------
    state_b = jax.random.normal(k_big, (300, D_IN), jnp.float32)
    v_ref_b = reference_forward(state_b, params)

    v32_b = jax.block_until_ready(
        value_network_forward(state_b, params, compute_dtype=jnp.float32))
    assert v32_b.shape == (300, 1)
    assert jnp.allclose(v32_b, v_ref_b, atol=1e-4, rtol=1e-4), "f32 multi-tile mismatch"

    v16_b = jax.block_until_ready(value_network_forward(state_b, params))
    assert v16_b.shape == (300, 1)
    assert jnp.allclose(v16_b, v_ref_b, atol=5e-2, rtol=5e-2), "bf16 multi-tile mismatch"

    print("KERNEL_OK")
</pallas_src>

<mosaic_0001>
module attributes {stable_mosaic.version = 11 : i64} {
  func.func @value_net_kernel(%arg0: i32, %arg1: memref<128x8xf32, #tpu.memory_space<vmem>>, %arg2: memref<32x8xf32, #tpu.memory_space<vmem>>, %arg3: memref<32x1xf32, #tpu.memory_space<vmem>>, %arg4: memref<32x32xf32, #tpu.memory_space<vmem>>, %arg5: memref<32x1xf32, #tpu.memory_space<vmem>>, %arg6: memref<32x32xf32, #tpu.memory_space<vmem>>, %arg7: memref<32x1xf32, #tpu.memory_space<vmem>>, %arg8: memref<1x32xf32, #tpu.memory_space<vmem>>, %arg9: memref<1x1xf32, #tpu.memory_space<smem>>, %arg10: memref<1x128xf32, #tpu.memory_space<vmem>>) attributes {dimension_semantics = [#tpu.dimension_semantics<parallel>], iteration_bounds = array<i64: 1>, scalar_prefetch = 0 : i64, scratch_operands = 0 : i64, tpu.core_type = #tpu.core_type<tc>, window_params = [{transform_indices = @transform_0, window_bounds = array<i64: 128, 8>}, {pipeline_mode = #tpu.pipeline_mode<synchronous>, transform_indices = @transform_1, window_bounds = array<i64: 32, 8>}, {pipeline_mode = #tpu.pipeline_mode<synchronous>, transform_indices = @transform_2, window_bounds = array<i64: 32, 1>}, {pipeline_mode = #tpu.pipeline_mode<synchronous>, transform_indices = @transform_3, window_bounds = array<i64: 32, 32>}, {pipeline_mode = #tpu.pipeline_mode<synchronous>, transform_indices = @transform_4, window_bounds = array<i64: 32, 1>}, {pipeline_mode = #tpu.pipeline_mode<synchronous>, transform_indices = @transform_5, window_bounds = array<i64: 32, 32>}, {pipeline_mode = #tpu.pipeline_mode<synchronous>, transform_indices = @transform_6, window_bounds = array<i64: 32, 1>}, {pipeline_mode = #tpu.pipeline_mode<synchronous>, transform_indices = @transform_7, window_bounds = array<i64: 1, 32>}, {transform_indices = @transform_8, window_bounds = array<i64: 1, 1>}, {transform_indices = @transform_9, window_bounds = array<i64: 1, 128>}]} {
    %c0 = arith.constant 0 : index
    %c0_0 = arith.constant 0 : index
    %0 = vector.load %arg1[%c0, %c0_0] : memref<128x8xf32, #tpu.memory_space<vmem>>, vector<128x8xf32>
    %c0_1 = arith.constant 0 : index
    %c0_2 = arith.constant 0 : index
    %1 = vector.load %arg2[%c0_1, %c0_2] : memref<32x8xf32, #tpu.memory_space<vmem>>, vector<32x8xf32>
    %cst = arith.constant dense<0.000000e+00> : vector<32x128xf32>
    %2 = tpu.matmul %1, %0, %cst {dimension_numbers = #tpu.dot_dimension_numbers<[1], [1], [0], [0], [0, 0, 1, 0], [], []>} : vector<32x8xf32>, vector<128x8xf32>, vector<32x128xf32> -> vector<32x128xf32>
    %c0_3 = arith.constant 0 : index
    %c0_4 = arith.constant 0 : index
    %3 = vector.load %arg3[%c0_3, %c0_4] : memref<32x1xf32, #tpu.memory_space<vmem>>, vector<32x1xf32>
    %4 = vector.broadcast %3 : vector<32x1xf32> to vector<32x128xf32>
    %5 = arith.addf %2, %4 : vector<32x128xf32>
    %6 = math.sin %5 : vector<32x128xf32>
    %c0_5 = arith.constant 0 : index
    %c0_6 = arith.constant 0 : index
    %7 = vector.load %arg4[%c0_5, %c0_6] : memref<32x32xf32, #tpu.memory_space<vmem>>, vector<32x32xf32>
    %cst_7 = arith.constant dense<0.000000e+00> : vector<32x128xf32>
    %8 = tpu.matmul %7, %6, %cst_7 {dimension_numbers = #tpu.dot_dimension_numbers<[1], [0], [0], [1], [0, 0, 1, 1], [], []>} : vector<32x32xf32>, vector<32x128xf32>, vector<32x128xf32> -> vector<32x128xf32>
    %c0_8 = arith.constant 0 : index
    %c0_9 = arith.constant 0 : index
    %9 = vector.load %arg5[%c0_8, %c0_9] : memref<32x1xf32, #tpu.memory_space<vmem>>, vector<32x1xf32>
    %10 = vector.broadcast %9 : vector<32x1xf32> to vector<32x128xf32>
    %11 = arith.addf %8, %10 : vector<32x128xf32>
    %12 = math.sin %11 : vector<32x128xf32>
    %c0_10 = arith.constant 0 : index
    %c0_11 = arith.constant 0 : index
    %13 = vector.load %arg6[%c0_10, %c0_11] : memref<32x32xf32, #tpu.memory_space<vmem>>, vector<32x32xf32>
    %cst_12 = arith.constant dense<0.000000e+00> : vector<32x128xf32>
    %14 = tpu.matmul %13, %12, %cst_12 {dimension_numbers = #tpu.dot_dimension_numbers<[1], [0], [0], [1], [0, 0, 1, 1], [], []>} : vector<32x32xf32>, vector<32x128xf32>, vector<32x128xf32> -> vector<32x128xf32>
    %c0_13 = arith.constant 0 : index
    %c0_14 = arith.constant 0 : index
    %15 = vector.load %arg7[%c0_13, %c0_14] : memref<32x1xf32, #tpu.memory_space<vmem>>, vector<32x1xf32>
    %16 = vector.broadcast %15 : vector<32x1xf32> to vector<32x128xf32>
    %17 = arith.addf %14, %16 : vector<32x128xf32>
    %18 = math.sin %17 : vector<32x128xf32>
    %c0_15 = arith.constant 0 : index
    %c0_16 = arith.constant 0 : index
    %19 = vector.load %arg8[%c0_15, %c0_16] : memref<1x32xf32, #tpu.memory_space<vmem>>, vector<1x32xf32>
    %cst_17 = arith.constant dense<0.000000e+00> : vector<1x128xf32>
    %20 = tpu.matmul %19, %18, %cst_17 {dimension_numbers = #tpu.dot_dimension_numbers<[1], [0], [0], [1], [0, 0, 1, 1], [], []>} : vector<1x32xf32>, vector<32x128xf32>, vector<1x128xf32> -> vector<1x128xf32>
    %c0_18 = arith.constant 0 : index
    %c0_19 = arith.constant 0 : index
    %21 = memref.load %arg9[%c0_18, %c0_19] : memref<1x1xf32, #tpu.memory_space<smem>>
    %22 = vector.broadcast %21 : f32 to vector<1x128xf32>
    %23 = arith.addf %20, %22 : vector<1x128xf32>
    %c0_20 = arith.constant 0 : index
    %c0_21 = arith.constant 0 : index
    %24 = vector.load %arg10[%c0_20, %c0_21] : memref<1x128xf32, #tpu.memory_space<vmem>>, vector<1x128xf32>
    tpu.vector_store %arg10[%c0_20, %c0_21], %23 {strides = array<i32>} : memref<1x128xf32, #tpu.memory_space<vmem>>, vector<1x128xf32>,
    return
  }
  func.func @transform_0(%arg0: i32) -> (i32, i32) {
    %c0_i32 = arith.constant 0 : i32
    %c0_i32_0 = arith.constant 0 : i32
    return %arg0, %c0_i32 : i32, i32
  }
  func.func @transform_1(%arg0: i32) -> (i32, i32) {
    %c0_i32 = arith.constant 0 : i32
    %c0_i32_0 = arith.constant 0 : i32
    %c0_i32_1 = arith.constant 0 : i32
    return %c0_i32, %c0_i32_0 : i32, i32
  }
  func.func @transform_2(%arg0: i32) -> (i32, i32) {
    %c0_i32 = arith.constant 0 : i32
    %c0_i32_0 = arith.constant 0 : i32
    %c0_i32_1 = arith.constant 0 : i32
    return %c0_i32, %c0_i32_0 : i32, i32
  }
  func.func @transform_3(%arg0: i32) -> (i32, i32) {
    %c0_i32 = arith.constant 0 : i32
    %c0_i32_0 = arith.constant 0 : i32
    %c0_i32_1 = arith.constant 0 : i32
    return %c0_i32, %c0_i32_0 : i32, i32
  }
  func.func @transform_4(%arg0: i32) -> (i32, i32) {
    %c0_i32 = arith.constant 0 : i32
    %c0_i32_0 = arith.constant 0 : i32
    %c0_i32_1 = arith.constant 0 : i32
    return %c0_i32, %c0_i32_0 : i32, i32
  }
  func.func @transform_5(%arg0: i32) -> (i32, i32) {
    %c0_i32 = arith.constant 0 : i32
    %c0_i32_0 = arith.constant 0 : i32
    %c0_i32_1 = arith.constant 0 : i32
    return %c0_i32, %c0_i32_0 : i32, i32
  }
  func.func @transform_6(%arg0: i32) -> (i32, i32) {
    %c0_i32 = arith.constant 0 : i32
    %c0_i32_0 = arith.constant 0 : i32
    %c0_i32_1 = arith.constant 0 : i32
    return %c0_i32, %c0_i32_0 : i32, i32
  }
  func.func @transform_7(%arg0: i32) -> (i32, i32) {
    %c0_i32 = arith.constant 0 : i32
    %c0_i32_0 = arith.constant 0 : i32
    %c0_i32_1 = arith.constant 0 : i32
    return %c0_i32, %c0_i32_0 : i32, i32
  }
  func.func @transform_8(%arg0: i32) -> (i32, i32) {
    %c0_i32 = arith.constant 0 : i32
    %c0_i32_0 = arith.constant 0 : i32
    %c0_i32_1 = arith.constant 0 : i32
    return %c0_i32, %c0_i32_0 : i32, i32
  }
  func.func @transform_9(%arg0: i32) -> (i32, i32) {
    %c0_i32 = arith.constant 0 : i32
    %c0_i32_0 = arith.constant 0 : i32
    return %c0_i32, %arg0 : i32, i32
  }
}

</mosaic_0001>

<llo_original>
// kernel: tpu_custom_call.1
$region0: #{tpu_custom_call.1}
  #allocation0 [shape = 'u32[]', space=smem, size = 0x4, offset = 0x4, fixed_abs, tag = 'smem constant byte address 0x4 - core index']
  #allocation1 [shape = 'u32[72,128]{1,0:T(1,128)}', space=vmem, size = 0x9000, scoped, tag = 'internal scratch']
  #allocation2 [shape = 'f32[1,1]{1,0:T(1,128)S(6)}', space=smem, size = 0x200, scoped, tag = 'scoped memory for tpu_custom_call.1']
  %s0 = inlined_call_operand.vmem [shape: f32[128,8], index: 0, kind: input, shape index: {}]
  %s1 = inlined_call_operand.vmem [shape: f32[32,8], index: 1, kind: input, shape index: {}]
  %s2 = inlined_call_operand.vmem [shape: f32[32,1], index: 2, kind: input, shape index: {}]
  %s3 = inlined_call_operand.vmem [shape: f32[32,32], index: 3, kind: input, shape index: {}]
  %s4 = inlined_call_operand.vmem [shape: f32[32,1], index: 4, kind: input, shape index: {}]
  %s5 = inlined_call_operand.vmem [shape: f32[32,32], index: 5, kind: input, shape index: {}]
  %s6 = inlined_call_operand.vmem [shape: f32[32,1], index: 6, kind: input, shape index: {}]
  %s7 = inlined_call_operand.vmem [shape: f32[1,32], index: 7, kind: input, shape index: {}]
  %s8 = inlined_call_operand.<no memory space> [shape: f32[1,1], index: 8, kind: input, shape index: {}]
  %s9 = inlined_call_operand.hbm [shape: f32[1,128], index: 9, kind: output, shape index: {}]
  %s10 = sld [smem:[#allocation0]]
  $region46: #{tpu_custom_call.1} parent=0
    _
  %s12 = ssub.s32 1, %s10
  %s13 = scalar_select 0, %s12, %s10
  %14 = sst [smem:[#allocation2]] %s8
  $region1: #{tpu_custom_call.1} parent=0
    #allocation3 [shape = 'u8[512]{0}', space=vmem, size = 0x400, scoped, tag = 'output window, operand 0, single buffered']
    #allocation4 [shape = 's32[1]{0}', space=sflag, size = 0x4, scoped, tag = 'scoped memory for tpu_custom_call.1']
    %15 = vsyncpa [#allocation4], 0
    // Predicated region
    $region2: #{tpu_custom_call.1} parent=1 // pred_check
      _
    $region3: #{tpu_custom_call.1} parent=1 // pred_check_branch
      %17 = sbr.rel (0) target = $region5
    $region4: #{tpu_custom_call.1} parent=1 // pred_region
      _
    $region5: #{tpu_custom_call.1} parent=1 // pred_fallthru
      _
    // Predicated region
    $region6: #{tpu_custom_call.1} parent=1 // pred_check
      _
    $region7: #{tpu_custom_call.1} parent=1 // pred_check_branch
      %19 = sbr.rel (0) target = $region9
    $region8: #{tpu_custom_call.1} parent=1 // pred_region
      _
    $region9: #{tpu_custom_call.1} parent=1 // pred_fallthru
      _
    // Predicated region
    $region10: #{tpu_custom_call.1} parent=1 // pred_check
      _
    $region11: #{tpu_custom_call.1} parent=1 // pred_check_branch
      %21 = sbr.rel (0) target = $region13
    $region12: #{tpu_custom_call.1} parent=1 // pred_region
      _
    $region13: #{tpu_custom_call.1} parent=1 // pred_fallthru
      _
    // Predicated region
    $region14: #{tpu_custom_call.1} parent=1 // pred_check
      _
    $region15: #{tpu_custom_call.1} parent=1 // pred_check_branch
      %23 = sbr.rel (0) target = $region17
    $region16: #{tpu_custom_call.1} parent=1 // pred_region
      _
    $region17: #{tpu_custom_call.1} parent=1 // pred_fallthru
      _
    // Predicated region
    $region18: #{tpu_custom_call.1} parent=1 // pred_check
      _
    $region19: #{tpu_custom_call.1} parent=1 // pred_check_branch
      %25 = sbr.rel (0) target = $region21
    $region20: #{tpu_custom_call.1} parent=1 // pred_region
      _
    $region21: #{tpu_custom_call.1} parent=1 // pred_fallthru
      _
    // Predicated region
    $region22: #{tpu_custom_call.1} parent=1 // pred_check
      _
    $region23: #{tpu_custom_call.1} parent=1 // pred_check_branch
      %27 = sbr.rel (0) target = $region25
    $region24: #{tpu_custom_call.1} parent=1 // pred_region
      _
    $region25: #{tpu_custom_call.1} parent=1 // pred_fallthru
      _
    // Predicated region
    $region26: #{tpu_custom_call.1} parent=1 // pred_check
      _
    $region27: #{tpu_custom_call.1} parent=1 // pred_check_branch
      %29 = sbr.rel (0) target = $region29
    $region28: #{tpu_custom_call.1} parent=1 // pred_region
      _
    $region29: #{tpu_custom_call.1} parent=1 // pred_fallthru
      _
    // Predicated region
    $region30: #{tpu_custom_call.1} parent=1 // pred_check
      _
    $region31: #{tpu_custom_call.1} parent=1 // pred_check_branch
      %31 = sbr.rel (0) target = $region33
    $region32: #{tpu_custom_call.1} parent=1 // pred_region
      _
    $region33: #{tpu_custom_call.1} parent=1 // pred_fallthru
      _
    // Predicated region
    $region34: #{tpu_custom_call.1} parent=1 // pred_check
      _
    $region35: #{tpu_custom_call.1} parent=1 // pred_check_branch
      %33 = sbr.rel (0) target = $region37
    $region36: #{tpu_custom_call.1} parent=1 // pred_region
      _
    $region37: #{tpu_custom_call.1} parent=1 // pred_fallthru
      _
    %v34 = vld [vmem:[%s0] sm:$0xff]
    %v35 = vld [vmem:[%s0 + $0x8] sm:$0xff]
    %v36 = vld [vmem:[%s0 + $0x10] sm:$0xff]
    %v37 = vld [vmem:[%s0 + $0x18] sm:$0xff]
    %v38 = vld [vmem:[%s0 + $0x20] sm:$0xff]
    %v39 = vld [vmem:[%s0 + $0x28] sm:$0xff]
    %v40 = vld [vmem:[%s0 + $0x30] sm:$0xff]
    %v41 = vld [vmem:[%s0 + $0x38] sm:$0xff]
    %v42 = vld [vmem:[%s0 + $0x40] sm:$0xff]
    %v43 = vld [vmem:[%s0 + $0x48] sm:$0xff]
    %v44 = vld [vmem:[%s0 + $0x50] sm:$0xff]
    %v45 = vld [vmem:[%s0 + $0x58] sm:$0xff]
    %v46 = vld [vmem:[%s0 + $0x60] sm:$0xff]
    %v47 = vld [vmem:[%s0 + $0x68] sm:$0xff]
    %v48 = vld [vmem:[%s0 + $0x70] sm:$0xff]
    %v49 = vld [vmem:[%s0 + $0x78] sm:$0xff]
    %v50 = vld [vmem:[%s1] sm:$0xff]
    %v51 = vld [vmem:[%s1 + $0x8] sm:$0xff]
    %v52 = vld [vmem:[%s1 + $0x10] sm:$0xff]
    %v53 = vld [vmem:[%s1 + $0x18] sm:$0xff]
    %v54 = vld [vmem:[%s2] sm:$0xff]
    %v55 = vld [vmem:[%s2 + $0x8] sm:$0xff]
    %v56 = vld [vmem:[%s2 + $0x10] sm:$0xff]
    %v57 = vld [vmem:[%s2 + $0x18] sm:$0xff]
    %59 = vset.pattern.permute.xlu0 0
    %60 = vperm.xlu0 %59, %v54
    %v61 = vpop.permute.xlu0 %60
    %64 = vset.pattern.permute.xlu0 0
    %65 = vperm.xlu0 %64, %v55
    %v66 = vpop.permute.xlu0 %65
    %69 = vset.pattern.permute.xlu0 0
    %70 = vperm.xlu0 %69, %v56
    %v71 = vpop.permute.xlu0 %70
    %74 = vset.pattern.permute.xlu0 0
    %75 = vperm.xlu0 %74, %v57
    %v76 = vpop.permute.xlu0 %75
    %vm78 = vcmask 64512
    %v80 = vsel %vm78, %v50, 0
    %v83 = vsel %vm78, %v51, 0
    %v86 = vsel %vm78, %v52, 0
    %v89 = vsel %vm78, %v53, 0
    %v92 = vsel %vm78, %v34, 0
    %v95 = vsel %vm78, %v35, 0
    %v98 = vsel %vm78, %v36, 0
    %v101 = vsel %vm78, %v37, 0
    %v104 = vsel %vm78, %v38, 0
    %v107 = vsel %vm78, %v39, 0
    %v110 = vsel %vm78, %v40, 0
    %v113 = vsel %vm78, %v41, 0
    %v116 = vsel %vm78, %v42, 0
    %v119 = vsel %vm78, %v43, 0
    %v122 = vsel %vm78, %v44, 0
    %v125 = vsel %vm78, %v45, 0
    %v128 = vsel %vm78, %v46, 0
    %v131 = vsel %vm78, %v47, 0
    %v134 = vsel %vm78, %v48, 0
    %v137 = vsel %vm78, %v49, 0
    %139 = vmatpush.xpose.msra.mxu0 %v137
    %140 = vmatpush.xpose.msra.mxu0 %v134
    %141 = vmatpush.xpose.msra.mxu0 %v131
    %142 = vmatpush.xpose.msra.mxu0 %v128
    %143 = vmatpush.xpose.msra.mxu0 %v125
    %144 = vmatpush.xpose.msra.mxu0 %v122
    %145 = vmatpush.xpose.msra.mxu0 %v119
    %146 = vmatpush.xpose.msra.mxu0 %v116
    %147 = vmatpush.xpose.msra.mxu0 %v113
    %148 = vmatpush.xpose.msra.mxu0 %v110
    %149 = vmatpush.xpose.msra.mxu0 %v107
    %150 = vmatpush.xpose.msra.mxu0 %v104
    %151 = vmatpush.xpose.msra.mxu0 %v101
    %152 = vmatpush.xpose.msra.mxu0 %v98
    %153 = vmatpush.xpose.msra.mxu0 %v95
    %154 = vmatpush.xpose.msra.mxu0 %v92
    %155 = vmatmul.f32.gmra.mxu0 %v80
    %v156 = vpop.f32.mrf.mxu0
    %v157 = vadd.f32 %v61, %v156
    %158 = vmatmul.f32.gmra.mxu0 %v83
    %v159 = vpop.f32.mrf.mxu0
    %v160 = vadd.f32 %v66, %v159
    %161 = vmatmul.f32.gmra.mxu0 %v86
    %v162 = vpop.f32.mrf.mxu0
    %v163 = vadd.f32 %v71, %v162
    %164 = vmatmul.f32.gmra.mxu0 %v89
    %v165 = vpop.f32.mrf.mxu0
    %v166 = vadd.f32 %v76, %v165
    %167 = vdwg.mxu0
    %v168 = vand.u32 2147483647, %v157
    %vm169 = vcmp.le.f32.partialorder %v168, 0.7853982
    %vm170 = vcmp.lt.s32.totalorder %v157, 0
    %v171 = vand.u32 %v157, 2139095040
    %v172 = vshrl.u32 %v171, 23
    %v173 = vsub.s32 %v172, 127
    %v174 = vand.u32 2147483647, %v157
    %v175 = vand.u32 %v174, 8388607
    %v176 = vor.u32 %v175, 8388608
    %v177 = vsub.s32 0, %v176
    %v178 = vadd.s32 %v173, 1
    %vm179 = vcmp.gt.s32.totalorder %v178, 0
    %v180 = vsel %vm179, %v178, 0
    %v181 = vshrl.u32 %v180, 5
    %v182 = vand.u32 %v180, 31
    %v183 = vsub.s32 32, %v182
    %v184 = vshrl.u32 683565275, %v183
    %v185 = vshll.u32 683565275, %v182
    %v186 = vshrl.u32 2475754826, %v183
    %v187 = vor.u32 %v185, %v186
    %v188 = vshll.u32 2475754826, %v182
    %v189 = vshrl.u32 2131351028, %v183
    %v190 = vor.u32 %v188, %v189
    %v191 = vshll.u32 2131351028, %v182
    %v192 = vshrl.u32 2102212464, %v183
    %v193 = vor.u32 %v191, %v192
    %v194 = vshll.u32 2102212464, %v182
    %v195 = vshrl.u32 920167782, %v183
    %v196 = vor.u32 %v194, %v195
    %v197 = vshll.u32 920167782, %v182
    %v198 = vshrl.u32 1326507024, %v183
    %v199 = vor.u32 %v197, %v198
    %vm200 = vcmp.lt.s32.totalorder %v181, 1
    %vm201 = vcmp.lt.s32.totalorder %v181, 2
    %vm202 = vcmp.lt.s32.totalorder %v181, 3
    %vm203 = vcmp.lt.s32.totalorder %v181, 4
    %v204 = vsel %vm200, %v184, %v187
    %v205 = vsel %vm203, %v193, 2102212464
    %v206 = vsel %vm202, %v190, %v205
    %v207 = vsel %vm201, %v204, %v206
    %v208 = vsel %vm200, %v187, %v190
    %v209 = vsel %vm203, %v196, 920167782
    %v210 = vsel %vm202, %v193, %v209
    %v211 = vsel %vm201, %v208, %v210
    %v212 = vsel %vm200, %v190, %v193
    %v213 = vsel %vm203, %v199, 1326507024
    %v214 = vsel %vm202, %v196, %v213
    %v215 = vsel %vm201, %v212, %v214
    %v216 = vshll.u32 %v176, 8
    %v217 = vand.u32 %v216, 65535
    %v218 = vshrl.u32 %v216, 16
    %v219 = vand.u32 %v215, 65535
    %v220 = vshrl.u32 %v215, 16
    %v221 = vmul.u32 %v217, %v219
    %v222 = vmul.u32 %v217, %v220
    %v223 = vmul.u32 %v218, %v219
    %v224 = vmul.u32 %v218, %v220
    %v225 = vshll.u32 %v222, 16
    %v226 = vshrl.u32 %v222, 16
    %v227 = vshll.u32 %v223, 16
    %v228 = vshrl.u32 %v223, 16
    %vm229 = vc.u32 %v221, %v225
    %v230 = vsel %vm229, 1, 0
    %v231 = vadd.s32 %v221, %v225
    %v232 = vadd.s32 %v224, %v230
    %vm233 = vc.u32 %v231, %v227
    %v234 = vsel %vm233, 1, 0
    %v235 = vadd.s32 %v231, %v227
    %v236 = vadd.s32 %v232, %v234
    %v237 = vadd.s32 %v236, %v226
    %v238 = vadd.s32 %v237, %v228
    %v239 = vand.u32 %v216, 65535
    %v240 = vshrl.u32 %v216, 16
    %v241 = vand.u32 %v211, 65535
    %v242 = vshrl.u32 %v211, 16
    %v243 = vmul.u32 %v239, %v241
    %v244 = vmul.u32 %v239, %v242
    %v245 = vmul.u32 %v240, %v241
    %v246 = vmul.u32 %v240, %v242
    %v247 = vshll.u32 %v244, 16
    %v248 = vshrl.u32 %v244, 16
    %v249 = vshll.u32 %v245, 16
    %v250 = vshrl.u32 %v245, 16
    %vm251 = vc.u32 %v243, %v247
    %v252 = vsel %vm251, 1, 0
    %v253 = vadd.s32 %v243, %v247
    %v254 = vadd.s32 %v246, %v252
    %vm255 = vc.u32 %v253, %v249
    %v256 = vsel %vm255, 1, 0
    %v257 = vadd.s32 %v253, %v249
    %v258 = vadd.s32 %v254, %v256
    %v259 = vadd.s32 %v258, %v248
    %v260 = vadd.s32 %v259, %v250
    %v261 = vmul.u32 %v216, %v207
    %v262 = vadd.s32 %v238, %v257
    %vm263 = vc.u32 %v238, %v257
    %v264 = vadd.s32 %v260, 1
    %v265 = vsel %vm263, %v264, %v260
    %v266 = vadd.s32 %v261, %v265
    %v267 = vadd.s32 %v266, 536870912
    %v268 = vshrl.u32 %v267, 30
    %v269 = vshll.u32 %v268, 30
    %v270 = vsub.s32 %v266, %v269
    %vm271 = vcmp.lt.s32.totalorder %v270, 0
    %v272 = vsub.s32 0, %v270
    %v273 = vsel %vm271, %v272, %v270
    %v274 = vclz %v273
    %v275 = vsub.s32 %v274, 2
    %vm276 = vcmp.gt.s32.totalorder 0, %v275
    %v277 = vsel %vm276, 0, %v275
    %v278 = vsub.s32 32, %v277
    %v279 = vshll.u32 %v270, %v277
    %v280 = vshrl.u32 %v262, %v278
    %v281 = vor.u32 %v279, %v280
    %v282 = vsub.s32 4294967266, %v277
    %v283 = vadd.s32 %v282, 127
    %v284 = vshll.u32 %v283, 23
    %v285 = vor.u32 4788187, %v284
    %v286 = vand.u32 2147483647, %v285
    %v288 = vcvt.s32.f32 %v281
    %v289 = vmul.f32 %v288, %v286
    %v290 = vxor.u32 %v289, 2147483648
    %v291 = vsel %vm170, %v290, %v289
    %v292 = vsub.s32 4, %v268
    %v293 = vsel %vm170, %v292, %v268
    %v294 = vsel %vm169, %v157, %v291
    %v295 = vsel %vm169, 0, %v293
    %v296 = vmul.f32 %v294, %v294
    %v297 = vmul.f32 %v296, -0.001358992
    %v298 = vadd.f32 %v297, 0.041655596
    %v299 = vmul.f32 %v296, %v298
    %v300 = vadd.f32 %v299, -0.4999988
    %v301 = vmul.f32 %v296, %v300
    %v302 = vadd.f32 1.0, %v301
    %v303 = vmul.f32 %v294, %v294
    %v304 = vmul.f32 %v303, -0.00019511016
    %v305 = vadd.f32 %v304, 0.008332121
    %v306 = vmul.f32 %v303, %v305
    %v307 = vadd.f32 %v306, -0.16666654
    %v308 = vmul.f32 %v303, %v307
    %v309 = vadd.f32 %v308, 1.0
    %v310 = vmul.f32 %v309, %v294
    %vm311 = vweird.f32 %v157
    %v312 = vadd.s32 %v295, 3
    %v313 = vand.u32 %v312, 3
    %vm314 = vcmp.lt.s32.totalorder %v313, 2
    %vm315 = vcmp.eq.s32.totalorder %v313, 0
    %v316 = vxor.u32 %v310, 2147483648
    %v317 = vsel %vm315, %v302, %v316
    %vm318 = vcmp.eq.s32.totalorder %v313, 2
    %v319 = vxor.u32 %v302, 2147483648
    %v320 = vsel %vm318, %v319, %v310
    %v321 = vsel %vm314, %v317, %v320
    %v322 = vsel %vm311, nan, %v321
    %v323 = vand.u32 2147483647, %v160
    %vm324 = vcmp.le.f32.partialorder %v323, 0.7853982
    %vm325 = vcmp.lt.s32.totalorder %v160, 0
    %v326 = vand.u32 %v160, 2139095040
    %v327 = vshrl.u32 %v326, 23
    %v328 = vsub.s32 %v327, 127
    %v329 = vand.u32 2147483647, %v160
    %v330 = vand.u32 %v329, 8388607
    %v331 = vor.u32 %v330, 8388608
    %v332 = vsub.s32 0, %v331
    %v333 = vadd.s32 %v328, 1
    %vm334 = vcmp.gt.s32.totalorder %v333, 0
    %v335 = vsel %vm334, %v333, 0
    %v336 = vshrl.u32 %v335, 5
    %v337 = vand.u32 %v335, 31
    %v338 = vsub.s32 32, %v337
    %v339 = vshrl.u32 683565275, %v338
    %v340 = vshll.u32 683565275, %v337
    %v341 = vshrl.u32 2475754826, %v338
    %v342 = vor.u32 %v340, %v341
    %v343 = vshll.u32 2475754826, %v337
    %v344 = vshrl.u32 2131351028, %v338
    %v345 = vor.u32 %v343, %v344
    %v346 = vshll.u32 2131351028, %v337
    %v347 = vshrl.u32 2102212464, %v338
    %v348 = vor.u32 %v346, %v347
    %v349 = vshll.u32 2102212464, %v337
    %v350 = vshrl.u32 920167782, %v338
    %v351 = vor.u32 %v349, %v350
    %v352 = vshll.u32 920167782, %v337
    %v353 = vshrl.u32 1326507024, %v338
    %v354 = vor.u32 %v352, %v353
    %vm355 = vcmp.lt.s32.totalorder %v336, 1
    %vm356 = vcmp.lt.s32.totalorder %v336, 2
    %vm357 = vcmp.lt.s32.totalorder %v336, 3
    %vm358 = vcmp.lt.s32.totalorder %v336, 4
    %v359 = vsel %vm355, %v339, %v342
    %v360 = vsel %vm358, %v348, 2102212464
    %v361 = vsel %vm357, %v345, %v360
    %v362 = vsel %vm356, %v359, %v361
    %v363 = vsel %vm355, %v342, %v345
    %v364 = vsel %vm358, %v351, 920167782
    %v365 = vsel %vm357, %v348, %v364
    %v366 = vsel %vm356, %v363, %v365
    %v367 = vsel %vm355, %v345, %v348
    %v368 = vsel %vm358, %v354, 1326507024
    %v369 = vsel %vm357, %v351, %v368
    %v370 = vsel %vm356, %v367, %v369
    %v371 = vshll.u32 %v331, 8
    %v372 = vand.u32 %v371, 65535
    %v373 = vshrl.u32 %v371, 16
    %v374 = vand.u32 %v370, 65535
    %v375 = vshrl.u32 %v370, 16
    %v376 = vmul.u32 %v372, %v374
    %v377 = vmul.u32 %v372, %v375
    %v378 = vmul.u32 %v373, %v374
    %v379 = vmul.u32 %v373, %v375
    %v380 = vshll.u32 %v377, 16
    %v381 = vshrl.u32 %v377, 16
    %v382 = vshll.u32 %v378, 16
    %v383 = vshrl.u32 %v378, 16
    %vm384 = vc.u32 %v376, %v380
    %v385 = vsel %vm384, 1, 0
    %v386 = vadd.s32 %v376, %v380
    %v387 = vadd.s32 %v379, %v385
    %vm388 = vc.u32 %v386, %v382
    %v389 = vsel %vm388, 1, 0
    %v390 = vadd.s32 %v386, %v382
    %v391 = vadd.s32 %v387, %v389
    %v392 = vadd.s32 %v391, %v381
    %v393 = vadd.s32 %v392, %v383
    %v394 = vand.u32 %v371, 65535
    %v395 = vshrl.u32 %v371, 16
    %v396 = vand.u32 %v366, 65535
    %v397 = vshrl.u32 %v366, 16
    %v398 = vmul.u32 %v394, %v396
    %v399 = vmul.u32 %v394, %v397
    %v400 = vmul.u32 %v395, %v396
    %v401 = vmul.u32 %v395, %v397
    %v402 = vshll.u32 %v399, 16
    %v403 = vshrl.u32 %v399, 16
    %v404 = vshll.u32 %v400, 16
    %v405 = vshrl.u32 %v400, 16
    %vm406 = vc.u32 %v398, %v402
    %v407 = vsel %vm406, 1, 0
    %v408 = vadd.s32 %v398, %v402
    %v409 = vadd.s32 %v401, %v407
    %vm410 = vc.u32 %v408, %v404
    %v411 = vsel %vm410, 1, 0
    %v412 = vadd.s32 %v408, %v404
    %v413 = vadd.s32 %v409, %v411
    %v414 = vadd.s32 %v413, %v403
    %v415 = vadd.s32 %v414, %v405
    %v416 = vmul.u32 %v371, %v362
    %v417 = vadd.s32 %v393, %v412
    %vm418 = vc.u32 %v393, %v412
    %v419 = vadd.s32 %v415, 1
    %v420 = vsel %vm418, %v419, %v415
    %v421 = vadd.s32 %v416, %v420
    %v422 = vadd.s32 %v421, 536870912
    %v423 = vshrl.u32 %v422, 30
    %v424 = vshll.u32 %v423, 30
    %v425 = vsub.s32 %v421, %v424
    %vm426 = vcmp.lt.s32.totalorder %v425, 0
    %v427 = vsub.s32 0, %v425
    %v428 = vsel %vm426, %v427, %v425
    %v429 = vclz %v428
    %v430 = vsub.s32 %v429, 2
    %vm431 = vcmp.gt.s32.totalorder 0, %v430
    %v432 = vsel %vm431, 0, %v430
    %v433 = vsub.s32 32, %v432
    %v434 = vshll.u32 %v425, %v432
    %v435 = vshrl.u32 %v417, %v433
    %v436 = vor.u32 %v434, %v435
    %v437 = vsub.s32 4294967266, %v432
    %v438 = vadd.s32 %v437, 127
    %v439 = vshll.u32 %v438, 23
    %v440 = vor.u32 4788187, %v439
    %v441 = vand.u32 2147483647, %v440
    %v443 = vcvt.s32.f32 %v436
    %v444 = vmul.f32 %v443, %v441
    %v445 = vxor.u32 %v444, 2147483648
    %v446 = vsel %vm325, %v445, %v444
    %v447 = vsub.s32 4, %v423
    %v448 = vsel %vm325, %v447, %v423
    %v449 = vsel %vm324, %v160, %v446
    %v450 = vsel %vm324, 0, %v448
    %v451 = vmul.f32 %v449, %v449
    %v452 = vmul.f32 %v451, -0.001358992
    %v453 = vadd.f32 %v452, 0.041655596
    %v454 = vmul.f32 %v451, %v453
    %v455 = vadd.f32 %v454, -0.4999988
    %v456 = vmul.f32 %v451, %v455
    %v457 = vadd.f32 1.0, %v456
    %v458 = vmul.f32 %v449, %v449
    %v459 = vmul.f32 %v458, -0.00019511016
    %v460 = vadd.f32 %v459, 0.008332121
    %v461 = vmul.f32 %v458, %v460
    %v462 = vadd.f32 %v461, -0.16666654
    %v463 = vmul.f32 %v458, %v462
    %v464 = vadd.f32 %v463, 1.0
    %v465 = vmul.f32 %v464, %v449
    %vm466 = vweird.f32 %v160
    %v467 = vadd.s32 %v450, 3
    %v468 = vand.u32 %v467, 3
    %vm469 = vcmp.lt.s32.totalorder %v468, 2
    %vm470 = vcmp.eq.s32.totalorder %v468, 0
    %v471 = vxor.u32 %v465, 2147483648
    %v472 = vsel %vm470, %v457, %v471
    %vm473 = vcmp.eq.s32.totalorder %v468, 2
    %v474 = vxor.u32 %v457, 2147483648
    %v475 = vsel %vm473, %v474, %v465
    %v476 = vsel %vm469, %v472, %v475
    %v477 = vsel %vm466, nan, %v476
    %v478 = vand.u32 2147483647, %v163
    %vm479 = vcmp.le.f32.partialorder %v478, 0.7853982
    %vm480 = vcmp.lt.s32.totalorder %v163, 0
    %v481 = vand.u32 %v163, 2139095040
    %v482 = vshrl.u32 %v481, 23
    %v483 = vsub.s32 %v482, 127
    %v484 = vand.u32 2147483647, %v163
    %v485 = vand.u32 %v484, 8388607
    %v486 = vor.u32 %v485, 8388608
    %v487 = vsub.s32 0, %v486
    %v488 = vadd.s32 %v483, 1
    %vm489 = vcmp.gt.s32.totalorder %v488, 0
    %v490 = vsel %vm489, %v488, 0
    %v491 = vshrl.u32 %v490, 5
    %v492 = vand.u32 %v490, 31
    %v493 = vsub.s32 32, %v492
    %v494 = vshrl.u32 683565275, %v493
    %v495 = vshll.u32 683565275, %v492
    %v496 = vshrl.u32 2475754826, %v493
    %v497 = vor.u32 %v495, %v496
    %v498 = vshll.u32 2475754826, %v492
    %v499 = vshrl.u32 2131351028, %v493
    %v500 = vor.u32 %v498, %v499
    %v501 = vshll.u32 2131351028, %v492
    %v502 = vshrl.u32 2102212464, %v493
    %v503 = vor.u32 %v501, %v502
    %v504 = vshll.u32 2102212464, %v492
    %v505 = vshrl.u32 920167782, %v493
    %v506 = vor.u32 %v504, %v505
    %v507 = vshll.u32 920167782, %v492
    %v508 = vshrl.u32 1326507024, %v493
    %v509 = vor.u32 %v507, %v508
    %vm510 = vcmp.lt.s32.totalorder %v491, 1
    %vm511 = vcmp.lt.s32.totalorder %v491, 2
    %vm512 = vcmp.lt.s32.totalorder %v491, 3
    %vm513 = vcmp.lt.s32.totalorder %v491, 4
    %v514 = vsel %vm510, %v494, %v497
    %v515 = vsel %vm513, %v503, 2102212464
    %v516 = vsel %vm512, %v500, %v515
    %v517 = vsel %vm511, %v514, %v516
    %v518 = vsel %vm510, %v497, %v500
    %v519 = vsel %vm513, %v506, 920167782
    %v520 = vsel %vm512, %v503, %v519
    %v521 = vsel %vm511, %v518, %v520
    %v522 = vsel %vm510, %v500, %v503
    %v523 = vsel %vm513, %v509, 1326507024
    %v524 = vsel %vm512, %v506, %v523
    %v525 = vsel %vm511, %v522, %v524
    %v526 = vshll.u32 %v486, 8
    %v527 = vand.u32 %v526, 65535
    %v528 = vshrl.u32 %v526, 16
    %v529 = vand.u32 %v525, 65535
    %v530 = vshrl.u32 %v525, 16
    %v531 = vmul.u32 %v527, %v529
    %v532 = vmul.u32 %v527, %v530
    %v533 = vmul.u32 %v528, %v529
    %v534 = vmul.u32 %v528, %v530
    %v535 = vshll.u32 %v532, 16
    %v536 = vshrl.u32 %v532, 16
    %v537 = vshll.u32 %v533, 16
    %v538 = vshrl.u32 %v533, 16
    %vm539 = vc.u32 %v531, %v535
    %v540 = vsel %vm539, 1, 0
    %v541 = vadd.s32 %v531, %v535
    %v542 = vadd.s32 %v534, %v540
    %vm543 = vc.u32 %v541, %v537
    %v544 = vsel %vm543, 1, 0
    %v545 = vadd.s32 %v541, %v537
    %v546 = vadd.s32 %v542, %v544
    %v547 = vadd.s32 %v546, %v536
    %v548 = vadd.s32 %v547, %v538
    %v549 = vand.u32 %v526, 65535
    %v550 = vshrl.u32 %v526, 16
    %v551 = vand.u32 %v521, 65535
    %v552 = vshrl.u32 %v521, 16
    %v553 = vmul.u32 %v549, %v551
    %v554 = vmul.u32 %v549, %v552
    %v555 = vmul.u32 %v550, %v551
    %v556 = vmul.u32 %v550, %v552
    %v557 = vshll.u32 %v554, 16
    %v558 = vshrl.u32 %v554, 16
    %v559 = vshll.u32 %v555, 16
    %v560 = vshrl.u32 %v555, 16
    %vm561 = vc.u32 %v553, %v557
    %v562 = vsel %vm561, 1, 0
    %v563 = vadd.s32 %v553, %v557
    %v564 = vadd.s32 %v556, %v562
    %vm565 = vc.u32 %v563, %v559
    %v566 = vsel %vm565, 1, 0
    %v567 = vadd.s32 %v563, %v559
    %v568 = vadd.s32 %v564, %v566
    %v569 = vadd.s32 %v568, %v558
    %v570 = vadd.s32 %v569, %v560
    %v571 = vmul.u32 %v526, %v517
    %v572 = vadd.s32 %v548, %v567
    %vm573 = vc.u32 %v548, %v567
    %v574 = vadd.s32 %v570, 1
    %v575 = vsel %vm573, %v574, %v570
    %v576 = vadd.s32 %v571, %v575
    %v577 = vadd.s32 %v576, 536870912
    %v578 = vshrl.u32 %v577, 30
    %v579 = vshll.u32 %v578, 30
    %v580 = vsub.s32 %v576, %v579
    %vm581 = vcmp.lt.s32.totalorder %v580, 0
    %v582 = vsub.s32 0, %v580
    %v583 = vsel %vm581, %v582, %v580
    %v584 = vclz %v583
    %v585 = vsub.s32 %v584, 2
    %vm586 = vcmp.gt.s32.totalorder 0, %v585
    %v587 = vsel %vm586, 0, %v585
    %v588 = vsub.s32 32, %v587
    %v589 = vshll.u32 %v580, %v587
    %v590 = vshrl.u32 %v572, %v588
    %v591 = vor.u32 %v589, %v590
    %v592 = vsub.s32 4294967266, %v587
    %v593 = vadd.s32 %v592, 127
    %v594 = vshll.u32 %v593, 23
    %v595 = vor.u32 4788187, %v594
    %v596 = vand.u32 2147483647, %v595
    %v598 = vcvt.s32.f32 %v591
    %v599 = vmul.f32 %v598, %v596
    %v600 = vxor.u32 %v599, 2147483648
    %v601 = vsel %vm480, %v600, %v599
    %v602 = vsub.s32 4, %v578
    %v603 = vsel %vm480, %v602, %v578
    %v604 = vsel %vm479, %v163, %v601
    %v605 = vsel %vm479, 0, %v603
    %v606 = vmul.f32 %v604, %v604
    %v607 = vmul.f32 %v606, -0.001358992
    %v608 = vadd.f32 %v607, 0.041655596
    %v609 = vmul.f32 %v606, %v608
    %v610 = vadd.f32 %v609, -0.4999988
    %v611 = vmul.f32 %v606, %v610
    %v612 = vadd.f32 1.0, %v611
    %v613 = vmul.f32 %v604, %v604
    %v614 = vmul.f32 %v613, -0.00019511016
    %v615 = vadd.f32 %v614, 0.008332121
    %v616 = vmul.f32 %v613, %v615
    %v617 = vadd.f32 %v616, -0.16666654
    %v618 = vmul.f32 %v613, %v617
    %v619 = vadd.f32 %v618, 1.0
    %v620 = vmul.f32 %v619, %v604
    %vm621 = vweird.f32 %v163
    %v622 = vadd.s32 %v605, 3
    %v623 = vand.u32 %v622, 3
    %vm624 = vcmp.lt.s32.totalorder %v623, 2
    %vm625 = vcmp.eq.s32.totalorder %v623, 0
    %v626 = vxor.u32 %v620, 2147483648
    %v627 = vsel %vm625, %v612, %v626
    %vm628 = vcmp.eq.s32.totalorder %v623, 2
    %v629 = vxor.u32 %v612, 2147483648
    %v630 = vsel %vm628, %v629, %v620
    %v631 = vsel %vm624, %v627, %v630
    %v632 = vsel %vm621, nan, %v631
    %v633 = vand.u32 2147483647, %v166
    %vm634 = vcmp.le.f32.partialorder %v633, 0.7853982
    %vm635 = vcmp.lt.s32.totalorder %v166, 0
    %v636 = vand.u32 %v166, 2139095040
    %v637 = vshrl.u32 %v636, 23
    %v638 = vsub.s32 %v637, 127
    %v639 = vand.u32 2147483647, %v166
    %v640 = vand.u32 %v639, 8388607
    %v641 = vor.u32 %v640, 8388608
    %v642 = vsub.s32 0, %v641
    %v643 = vadd.s32 %v638, 1
    %vm644 = vcmp.gt.s32.totalorder %v643, 0
    %v645 = vsel %vm644, %v643, 0
    %v646 = vshrl.u32 %v645, 5
    %v647 = vand.u32 %v645, 31
    %v648 = vsub.s32 32, %v647
    %v649 = vshrl.u32 683565275, %v648
    %v650 = vshll.u32 683565275, %v647
    %v651 = vshrl.u32 2475754826, %v648
    %v652 = vor.u32 %v650, %v651
    %v653 = vshll.u32 2475754826, %v647
    %v654 = vshrl.u32 2131351028, %v648
    %v655 = vor.u32 %v653, %v654
    %v656 = vshll.u32 2131351028, %v647
    %v657 = vshrl.u32 2102212464, %v648
    %v658 = vor.u32 %v656, %v657
    %v659 = vshll.u32 2102212464, %v647
    %v660 = vshrl.u32 920167782, %v648
    %v661 = vor.u32 %v659, %v660
    %v662 = vshll.u32 920167782, %v647
    %v663 = vshrl.u32 1326507024, %v648
    %v664 = vor.u32 %v662, %v663
    %vm665 = vcmp.lt.s32.totalorder %v646, 1
    %vm666 = vcmp.lt.s32.totalorder %v646, 2
    %vm667 = vcmp.lt.s32.totalorder %v646, 3
    %vm668 = vcmp.lt.s32.totalorder %v646, 4
    %v669 = vsel %vm665, %v649, %v652
    %v670 = vsel %vm668, %v658, 2102212464
    %v671 = vsel %vm667, %v655, %v670
    %v672 = vsel %vm666, %v669, %v671
    %v673 = vsel %vm665, %v652, %v655
    %v674 = vsel %vm668, %v661, 920167782
    %v675 = vsel %vm667, %v658, %v674
    %v676 = vsel %vm666, %v673, %v675
    %v677 = vsel %vm665, %v655, %v658
    %v678 = vsel %vm668, %v664, 1326507024
    %v679 = vsel %vm667, %v661, %v678
    %v680 = vsel %vm666, %v677, %v679
    %v681 = vshll.u32 %v641, 8
    %v682 = vand.u32 %v681, 65535
    %v683 = vshrl.u32 %v681, 16
    %v684 = vand.u32 %v680, 65535
    %v685 = vshrl.u32 %v680, 16
    %v686 = vmul.u32 %v682, %v684
    %v687 = vmul.u32 %v682, %v685
    %v688 = vmul.u32 %v683, %v684
    %v689 = vmul.u32 %v683, %v685
    %v690 = vshll.u32 %v687, 16
    %v691 = vshrl.u32 %v687, 16
    %v692 = vshll.u32 %v688, 16
    %v693 = vshrl.u32 %v688, 16
    %vm694 = vc.u32 %v686, %v690
    %v695 = vsel %vm694, 1, 0
    %v696 = vadd.s32 %v686, %v690
    %v697 = vadd.s32 %v689, %v695
    %vm698 = vc.u32 %v696, %v692
    %v699 = vsel %vm698, 1, 0
    %v700 = vadd.s32 %v696, %v692
    %v701 = vadd.s32 %v697, %v699
    %v702 = vadd.s32 %v701, %v691
    %v703 = vadd.s32 %v702, %v693
    %v704 = vand.u32 %v681, 65535
    %v705 = vshrl.u32 %v681, 16
    %v706 = vand.u32 %v676, 65535
    %v707 = vshrl.u32 %v676, 16
    %v708 = vmul.u32 %v704, %v706
    %v709 = vmul.u32 %v704, %v707
    %v710 = vmul.u32 %v705, %v706
    %v711 = vmul.u32 %v705, %v707
    %v712 = vshll.u32 %v709, 16
    %v713 = vshrl.u32 %v709, 16
    %v714 = vshll.u32 %v710, 16
    %v715 = vshrl.u32 %v710, 16
    %vm716 = vc.u32 %v708, %v712
    %v717 = vsel %vm716, 1, 0
    %v718 = vadd.s32 %v708, %v712
    %v719 = vadd.s32 %v711, %v717
    %vm720 = vc.u32 %v718, %v714
    %v721 = vsel %vm720, 1, 0
    %v722 = vadd.s32 %v718, %v714
    %v723 = vadd.s32 %v719, %v721
    %v724 = vadd.s32 %v723, %v713
    %v725 = vadd.s32 %v724, %v715
    %v726 = vmul.u32 %v681, %v672
    %v727 = vadd.s32 %v703, %v722
    %vm728 = vc.u32 %v703, %v722
    %v729 = vadd.s32 %v725, 1
    %v730 = vsel %vm728, %v729, %v725
    %v731 = vadd.s32 %v726, %v730
    %v732 = vadd.s32 %v731, 536870912
    %v733 = vshrl.u32 %v732, 30
    %v734 = vshll.u32 %v733, 30
    %v735 = vsub.s32 %v731, %v734
    %vm736 = vcmp.lt.s32.totalorder %v735, 0
    %v737 = vsub.s32 0, %v735
    %v738 = vsel %vm736, %v737, %v735
    %v739 = vclz %v738
    %v740 = vsub.s32 %v739, 2
    %vm741 = vcmp.gt.s32.totalorder 0, %v740
    %v742 = vsel %vm741, 0, %v740
    %v743 = vsub.s32 32, %v742
    %v744 = vshll.u32 %v735, %v742
    %v745 = vshrl.u32 %v727, %v743
    %v746 = vor.u32 %v744, %v745
    %v747 = vsub.s32 4294967266, %v742
    %v748 = vadd.s32 %v747, 127
    %v749 = vshll.u32 %v748, 23
    %v750 = vor.u32 4788187, %v749
    %v751 = vand.u32 2147483647, %v750
    %v753 = vcvt.s32.f32 %v746
    %v754 = vmul.f32 %v753, %v751
    %v755 = vxor.u32 %v754, 2147483648
    %v756 = vsel %vm635, %v755, %v754
    %v757 = vsub.s32 4, %v733
    %v758 = vsel %vm635, %v757, %v733
    %v759 = vsel %vm634, %v166, %v756
    %v760 = vsel %vm634, 0, %v758
    %v761 = vmul.f32 %v759, %v759
    %v762 = vmul.f32 %v761, -0.001358992
    %v763 = vadd.f32 %v762, 0.041655596
    %v764 = vmul.f32 %v761, %v763
    %v765 = vadd.f32 %v764, -0.4999988
    %v766 = vmul.f32 %v761, %v765
    %v767 = vadd.f32 1.0, %v766
    %v768 = vmul.f32 %v759, %v759
    %v769 = vmul.f32 %v768, -0.00019511016
    %v770 = vadd.f32 %v769, 0.008332121
    %v771 = vmul.f32 %v768, %v770
    %v772 = vadd.f32 %v771, -0.16666654
    %v773 = vmul.f32 %v768, %v772
    %v774 = vadd.f32 %v773, 1.0
    %v775 = vmul.f32 %v774, %v759
    %vm776 = vweird.f32 %v166
    %v777 = vadd.s32 %v760, 3
    %v778 = vand.u32 %v777, 3
    %vm779 = vcmp.lt.s32.totalorder %v778, 2
    %vm780 = vcmp.eq.s32.totalorder %v778, 0
    %v781 = vxor.u32 %v775, 2147483648
    %v782 = vsel %vm780, %v767, %v781
    %vm783 = vcmp.eq.s32.totalorder %v778, 2
    %v784 = vxor.u32 %v767, 2147483648
    %v785 = vsel %vm783, %v784, %v775
    %v786 = vsel %vm779, %v782, %v785
    %v787 = vsel %vm776, nan, %v786
    %v788 = vld [vmem:[%s3] sm:$0xff]
    %v789 = vld [vmem:[%s3 + $0x8] sm:$0xff]
    %v790 = vld [vmem:[%s3 + $0x10] sm:$0xff]
    %v791 = vld [vmem:[%s3 + $0x18] sm:$0xff]
    %v792 = vld [vmem:[%s4] sm:$0xff]
    %v793 = vld [vmem:[%s4 + $0x8] sm:$0xff]
    %v794 = vld [vmem:[%s4 + $0x10] sm:$0xff]
    %v795 = vld [vmem:[%s4 + $0x18] sm:$0xff]
    %797 = vset.pattern.permute.xlu0 0
    %798 = vperm.xlu0 %797, %v792
    %v799 = vpop.permute.xlu0 %798
    %802 = vset.pattern.permute.xlu0 0
    %803 = vperm.xlu0 %802, %v793
    %v804 = vpop.permute.xlu0 %803
    %807 = vset.pattern.permute.xlu0 0
    %808 = vperm.xlu0 %807, %v794
    %v809 = vpop.permute.xlu0 %808
    %812 = vset.pattern.permute.xlu0 0
    %813 = vperm.xlu0 %812, %v795
    %v814 = vpop.permute.xlu0 %813
    %vm816 = vcmask 261120
    %v818 = vsel %vm816, %v788, 0
    %v821 = vsel %vm816, %v789, 0
    %v824 = vsel %vm816, %v790, 0
    %v827 = vsel %vm816, %v791, 0
    %829 = vmatpush.msra.mxu0 0.0
    %830 = vmatpush.msra.mxu0 0.0
    %831 = vmatpush.msra.mxu0 0.0
    %832 = vmatpush.msra.mxu0 0.0
    %833 = vmatpush.msra.mxu0 0.0
    %834 = vmatpush.msra.mxu0 0.0
    %835 = vmatpush.msra.mxu0 0.0
    %836 = vmatpush.msra.mxu0 0.0
    %837 = vmatpush.msra.mxu0 0.0
    %838 = vmatpush.msra.mxu0 0.0
    %839 = vmatpush.msra.mxu0 0.0
    %840 = vmatpush.msra.mxu0 0.0
    %841 = vmatpush.msra.mxu0 %v787
    %842 = vmatpush.msra.mxu0 %v632
    %843 = vmatpush.msra.mxu0 %v477
    %844 = vmatpush.msra.mxu0 %v322
    %845 = vmatmul.f32.gmra.mxu0 %v818
    %v846 = vpop.f32.mrf.mxu0
    %v847 = vadd.f32 %v799, %v846
    %848 = vmatmul.f32.gmra.mxu0 %v821
    %v849 = vpop.f32.mrf.mxu0
    %v850 = vadd.f32 %v804, %v849
    %851 = vmatmul.f32.gmra.mxu0 %v824
    %v852 = vpop.f32.mrf.mxu0
    %v853 = vadd.f32 %v809, %v852
    %854 = vmatmul.f32.gmra.mxu0 %v827
    %v855 = vpop.f32.mrf.mxu0
    %v856 = vadd.f32 %v814, %v855
    %857 = vdwg.mxu0
    %v858 = vand.u32 2147483647, %v847
    %vm859 = vcmp.le.f32.partialorder %v858, 0.7853982
    %vm860 = vcmp.lt.s32.totalorder %v847, 0
    %v861 = vand.u32 %v847, 2139095040
    %v862 = vshrl.u32 %v861, 23
    %v863 = vsub.s32 %v862, 127
    %v864 = vand.u32 2147483647, %v847
    %v865 = vand.u32 %v864, 8388607
    %v866 = vor.u32 %v865, 8388608
    %v867 = vsub.s32 0, %v866
    %v868 = vadd.s32 %v863, 1
    %vm869 = vcmp.gt.s32.totalorder %v868, 0
    %v870 = vsel %vm869, %v868, 0
    %v871 = vshrl.u32 %v870, 5
    %v872 = vand.u32 %v870, 31
    %v873 = vsub.s32 32, %v872
    %v874 = vshrl.u32 683565275, %v873
    %v875 = vshll.u32 683565275, %v872
    %v876 = vshrl.u32 2475754826, %v873
    %v877 = vor.u32 %v875, %v876
    %v878 = vshll.u32 2475754826, %v872
    %v879 = vshrl.u32 2131351028, %v873
    %v880 = vor.u32 %v878, %v879
    %v881 = vshll.u32 2131351028, %v872
    %v882 = vshrl.u32 2102212464, %v873
    %v883 = vor.u32 %v881, %v882
    %v884 = vshll.u32 2102212464, %v872
    %v885 = vshrl.u32 920167782, %v873
    %v886 = vor.u32 %v884, %v885
    %v887 = vshll.u32 920167782, %v872
    %v888 = vshrl.u32 1326507024, %v873
    %v889 = vor.u32 %v887, %v888
    %vm890 = vcmp.lt.s32.totalorder %v871, 1
    %vm891 = vcmp.lt.s32.totalorder %v871, 2
    %vm892 = vcmp.lt.s32.totalorder %v871, 3
    %vm893 = vcmp.lt.s32.totalorder %v871, 4
    %v894 = vsel %vm890, %v874, %v877
    %v895 = vsel %vm893, %v883, 2102212464
    %v896 = vsel %vm892, %v880, %v895
    %v897 = vsel %vm891, %v894, %v896
    %v898 = vsel %vm890, %v877, %v880
    %v899 = vsel %vm893, %v886, 920167782
    %v900 = vsel %vm892, %v883, %v899
    %v901 = vsel %vm891, %v898, %v900
    %v902 = vsel %vm890, %v880, %v883
    %v903 = vsel %vm893, %v889, 1326507024
    %v904 = vsel %vm892, %v886, %v903
    %v905 = vsel %vm891, %v902, %v904
    %v906 = vshll.u32 %v866, 8
    %v907 = vand.u32 %v906, 65535
    %v908 = vshrl.u32 %v906, 16
    %v909 = vand.u32 %v905, 65535
    %v910 = vshrl.u32 %v905, 16
    %v911 = vmul.u32 %v907, %v909
    %v912 = vmul.u32 %v907, %v910
    %v913 = vmul.u32 %v908, %v909
    %v914 = vmul.u32 %v908, %v910
    %v915 = vshll.u32 %v912, 16
    %v916 = vshrl.u32 %v912, 16
    %v917 = vshll.u32 %v913, 16
    %v918 = vshrl.u32 %v913, 16
    %vm919 = vc.u32 %v911, %v915
    %v920 = vsel %vm919, 1, 0
    %v921 = vadd.s32 %v911, %v915
    %v922 = vadd.s32 %v914, %v920
    %vm923 = vc.u32 %v921, %v917
    %v924 = vsel %vm923, 1, 0
    %v925 = vadd.s32 %v921, %v917
    %v926 = vadd.s32 %v922, %v924
    %v927 = vadd.s32 %v926, %v916
    %v928 = vadd.s32 %v927, %v918
    %v929 = vand.u32 %v906, 65535
    %v930 = vshrl.u32 %v906, 16
    %v931 = vand.u32 %v901, 65535
    %v932 = vshrl.u32 %v901, 16
    %v933 = vmul.u32 %v929, %v931
    %v934 = vmul.u32 %v929, %v932
    %v935 = vmul.u32 %v930, %v931
    %v936 = vmul.u32 %v930, %v932
    %v937 = vshll.u32 %v934, 16
    %v938 = vshrl.u32 %v934, 16
    %v939 = vshll.u32 %v935, 16
    %v940 = vshrl.u32 %v935, 16
    %vm941 = vc.u32 %v933, %v937
    %v942 = vsel %vm941, 1, 0
    %v943 = vadd.s32 %v933, %v937
    %v944 = vadd.s32 %v936, %v942
    %vm945 = vc.u32 %v943, %v939
    %v946 = vsel %vm945, 1, 0
    %v947 = vadd.s32 %v943, %v939
    %v948 = vadd.s32 %v944, %v946
    %v949 = vadd.s32 %v948, %v938
    %v950 = vadd.s32 %v949, %v940
    %v951 = vmul.u32 %v906, %v897
    %v952 = vadd.s32 %v928, %v947
    %vm953 = vc.u32 %v928, %v947
    %v954 = vadd.s32 %v950, 1
    %v955 = vsel %vm953, %v954, %v950
    %v956 = vadd.s32 %v951, %v955
    %v957 = vadd.s32 %v956, 536870912
    %v958 = vshrl.u32 %v957, 30
    %v959 = vshll.u32 %v958, 30
    %v960 = vsub.s32 %v956, %v959
    %vm961 = vcmp.lt.s32.totalorder %v960, 0
    %v962 = vsub.s32 0, %v960
    %v963 = vsel %vm961, %v962, %v960
    %v964 = vclz %v963
    %v965 = vsub.s32 %v964, 2
    %vm966 = vcmp.gt.s32.totalorder 0, %v965
    %v967 = vsel %vm966, 0, %v965
    %v968 = vsub.s32 32, %v967
    %v969 = vshll.u32 %v960, %v967
    %v970 = vshrl.u32 %v952, %v968
    %v971 = vor.u32 %v969, %v970
    %v972 = vsub.s32 4294967266, %v967
    %v973 = vadd.s32 %v972, 127
    %v974 = vshll.u32 %v973, 23
    %v975 = vor.u32 4788187, %v974
    %v976 = vand.u32 2147483647, %v975
    %v978 = vcvt.s32.f32 %v971
    %v979 = vmul.f32 %v978, %v976
    %v980 = vxor.u32 %v979, 2147483648
    %v981 = vsel %vm860, %v980, %v979
    %v982 = vsub.s32 4, %v958
    %v983 = vsel %vm860, %v982, %v958
    %v984 = vsel %vm859, %v847, %v981
    %v985 = vsel %vm859, 0, %v983
    %v986 = vmul.f32 %v984, %v984
    %v987 = vmul.f32 %v986, -0.001358992
    %v988 = vadd.f32 %v987, 0.041655596
    %v989 = vmul.f32 %v986, %v988
    %v990 = vadd.f32 %v989, -0.4999988
    %v991 = vmul.f32 %v986, %v990
    %v992 = vadd.f32 1.0, %v991
    %v993 = vmul.f32 %v984, %v984
    %v994 = vmul.f32 %v993, -0.00019511016
    %v995 = vadd.f32 %v994, 0.008332121
    %v996 = vmul.f32 %v993, %v995
    %v997 = vadd.f32 %v996, -0.16666654
    %v998 = vmul.f32 %v993, %v997
    %v999 = vadd.f32 %v998, 1.0
    %v1000 = vmul.f32 %v999, %v984
    %vm1001 = vweird.f32 %v847
    %v1002 = vadd.s32 %v985, 3
    %v1003 = vand.u32 %v1002, 3
    %vm1004 = vcmp.lt.s32.totalorder %v1003, 2
    %vm1005 = vcmp.eq.s32.totalorder %v1003, 0
    %v1006 = vxor.u32 %v1000, 2147483648
    %v1007 = vsel %vm1005, %v992, %v1006
    %vm1008 = vcmp.eq.s32.totalorder %v1003, 2
    %v1009 = vxor.u32 %v992, 2147483648
    %v1010 = vsel %vm1008, %v1009, %v1000
    %v1011 = vsel %vm1004, %v1007, %v1010
    %v1012 = vsel %vm1001, nan, %v1011
    %v1013 = vand.u32 2147483647, %v850
    %vm1014 = vcmp.le.f32.partialorder %v1013, 0.7853982
    %vm1015 = vcmp.lt.s32.totalorder %v850, 0
    %v1016 = vand.u32 %v850, 2139095040
    %v1017 = vshrl.u32 %v1016, 23
    %v1018 = vsub.s32 %v1017, 127
    %v1019 = vand.u32 2147483647, %v850
    %v1020 = vand.u32 %v1019, 8388607
    %v1021 = vor.u32 %v1020, 8388608
    %v1022 = vsub.s32 0, %v1021
    %v1023 = vadd.s32 %v1018, 1
    %vm1024 = vcmp.gt.s32.totalorder %v1023, 0
    %v1025 = vsel %vm1024, %v1023, 0
    %v1026 = vshrl.u32 %v1025, 5
    %v1027 = vand.u32 %v1025, 31
    %v1028 = vsub.s32 32, %v1027
    %v1029 = vshrl.u32 683565275, %v1028
    %v1030 = vshll.u32 683565275, %v1027
    %v1031 = vshrl.u32 2475754826, %v1028
    %v1032 = vor.u32 %v1030, %v1031
    %v1033 = vshll.u32 2475754826, %v1027
    %v1034 = vshrl.u32 2131351028, %v1028
    %v1035 = vor.u32 %v1033, %v1034
    %v1036 = vshll.u32 2131351028, %v1027
    %v1037 = vshrl.u32 2102212464, %v1028
    %v1038 = vor.u32 %v1036, %v1037
    %v1039 = vshll.u32 2102212464, %v1027
    %v1040 = vshrl.u32 920167782, %v1028
    %v1041 = vor.u32 %v1039, %v1040
    %v1042 = vshll.u32 920167782, %v1027
    %v1043 = vshrl.u32 1326507024, %v1028
    %v1044 = vor.u32 %v1042, %v1043
    %vm1045 = vcmp.lt.s32.totalorder %v1026, 1
    %vm1046 = vcmp.lt.s32.totalorder %v1026, 2
    %vm1047 = vcmp.lt.s32.totalorder %v1026, 3
    %vm1048 = vcmp.lt.s32.totalorder %v1026, 4
    %v1049 = vsel %vm1045, %v1029, %v1032
    %v1050 = vsel %vm1048, %v1038, 2102212464
    %v1051 = vsel %vm1047, %v1035, %v1050
    %v1052 = vsel %vm1046, %v1049, %v1051
    %v1053 = vsel %vm1045, %v1032, %v1035
    %v1054 = vsel %vm1048, %v1041, 920167782
    %v1055 = vsel %vm1047, %v1038, %v1054
    %v1056 = vsel %vm1046, %v1053, %v1055
    %v1057 = vsel %vm1045, %v1035, %v1038
    %v1058 = vsel %vm1048, %v1044, 1326507024
    %v1059 = vsel %vm1047, %v1041, %v1058
    %v1060 = vsel %vm1046, %v1057, %v1059
    %v1061 = vshll.u32 %v1021, 8
    %v1062 = vand.u32 %v1061, 65535
    %v1063 = vshrl.u32 %v1061, 16
    %v1064 = vand.u32 %v1060, 65535
    %v1065 = vshrl.u32 %v1060, 16
    %v1066 = vmul.u32 %v1062, %v1064
    %v1067 = vmul.u32 %v1062, %v1065
    %v1068 = vmul.u32 %v1063, %v1064
    %v1069 = vmul.u32 %v1063, %v1065
    %v1070 = vshll.u32 %v1067, 16
    %v1071 = vshrl.u32 %v1067, 16
    %v1072 = vshll.u32 %v1068, 16
    %v1073 = vshrl.u32 %v1068, 16
    %vm1074 = vc.u32 %v1066, %v1070
    %v1075 = vsel %vm1074, 1, 0
    %v1076 = vadd.s32 %v1066, %v1070
    %v1077 = vadd.s32 %v1069, %v1075
    %vm1078 = vc.u32 %v1076, %v1072
    %v1079 = vsel %vm1078, 1, 0
    %v1080 = vadd.s32 %v1076, %v1072
    %v1081 = vadd.s32 %v1077, %v1079
    %v1082 = vadd.s32 %v1081, %v1071
    %v1083 = vadd.s32 %v1082, %v1073
    %v1084 = vand.u32 %v1061, 65535
    %v1085 = vshrl.u32 %v1061, 16
    %v1086 = vand.u32 %v1056, 65535
    %v1087 = vshrl.u32 %v1056, 16
    %v1088 = vmul.u32 %v1084, %v1086
    %v1089 = vmul.u32 %v1084, %v1087
    %v1090 = vmul.u32 %v1085, %v1086
    %v1091 = vmul.u32 %v1085, %v1087
    %v1092 = vshll.u32 %v1089, 16
    %v1093 = vshrl.u32 %v1089, 16
    %v1094 = vshll.u32 %v1090, 16
    %v1095 = vshrl.u32 %v1090, 16
    %vm1096 = vc.u32 %v1088, %v1092
    %v1097 = vsel %vm1096, 1, 0
    %v1098 = vadd.s32 %v1088, %v1092
    %v1099 = vadd.s32 %v1091, %v1097
    %vm1100 = vc.u32 %v1098, %v1094
    %v1101 = vsel %vm1100, 1, 0
    %v1102 = vadd.s32 %v1098, %v1094
    %v1103 = vadd.s32 %v1099, %v1101
    %v1104 = vadd.s32 %v1103, %v1093
    %v1105 = vadd.s32 %v1104, %v1095
    %v1106 = vmul.u32 %v1061, %v1052
    %v1107 = vadd.s32 %v1083, %v1102
    %vm1108 = vc.u32 %v1083, %v1102
    %v1109 = vadd.s32 %v1105, 1
    %v1110 = vsel %vm1108, %v1109, %v1105
    %v1111 = vadd.s32 %v1106, %v1110
    %v1112 = vadd.s32 %v1111, 536870912
    %v1113 = vshrl.u32 %v1112, 30
    %v1114 = vshll.u32 %v1113, 30
    %v1115 = vsub.s32 %v1111, %v1114
    %vm1116 = vcmp.lt.s32.totalorder %v1115, 0
    %v1117 = vsub.s32 0, %v1115
    %v1118 = vsel %vm1116, %v1117, %v1115
    %v1119 = vclz %v1118
    %v1120 = vsub.s32 %v1119, 2
    %vm1121 = vcmp.gt.s32.totalorder 0, %v1120
    %v1122 = vsel %vm1121, 0, %v1120
    %v1123 = vsub.s32 32, %v1122
    %v1124 = vshll.u32 %v1115, %v1122
    %v1125 = vshrl.u32 %v1107, %v1123
    %v1126 = vor.u32 %v1124, %v1125
    %v1127 = vsub.s32 4294967266, %v1122
    %v1128 = vadd.s32 %v1127, 127
    %v1129 = vshll.u32 %v1128, 23
    %v1130 = vor.u32 4788187, %v1129
    %v1131 = vand.u32 2147483647, %v1130
    %v1133 = vcvt.s32.f32 %v1126
    %v1134 = vmul.f32 %v1133, %v1131
    %v1135 = vxor.u32 %v1134, 2147483648
    %v1136 = vsel %vm1015, %v1135, %v1134
    %v1137 = vsub.s32 4, %v1113
    %v1138 = vsel %vm1015, %v1137, %v1113
    %v1139 = vsel %vm1014, %v850, %v1136
    %v1140 = vsel %vm1014, 0, %v1138
    %v1141 = vmul.f32 %v1139, %v1139
    %v1142 = vmul.f32 %v1141, -0.001358992
    %v1143 = vadd.f32 %v1142, 0.041655596
    %v1144 = vmul.f32 %v1141, %v1143
    %v1145 = vadd.f32 %v1144, -0.4999988
    %v1146 = vmul.f32 %v1141, %v1145
    %v1147 = vadd.f32 1.0, %v1146
    %v1148 = vmul.f32 %v1139, %v1139
    %v1149 = vmul.f32 %v1148, -0.00019511016
    %v1150 = vadd.f32 %v1149, 0.008332121
    %v1151 = vmul.f32 %v1148, %v1150
    %v1152 = vadd.f32 %v1151, -0.16666654
    %v1153 = vmul.f32 %v1148, %v1152
    %v1154 = vadd.f32 %v1153, 1.0
    %v1155 = vmul.f32 %v1154, %v1139
    %vm1156 = vweird.f32 %v850
    %v1157 = vadd.s32 %v1140, 3
    %v1158 = vand.u32 %v1157, 3
    %vm1159 = vcmp.lt.s32.totalorder %v1158, 2
    %vm1160 = vcmp.eq.s32.totalorder %v1158, 0
    %v1161 = vxor.u32 %v1155, 2147483648
    %v1162 = vsel %vm1160, %v1147, %v1161
    %vm1163 = vcmp.eq.s32.totalorder %v1158, 2
    %v1164 = vxor.u32 %v1147, 2147483648
    %v1165 = vsel %vm1163, %v1164, %v1155
    %v1166 = vsel %vm1159, %v1162, %v1165
    %v1167 = vsel %vm1156, nan, %v1166
    %v1168 = vand.u32 2147483647, %v853
    %vm1169 = vcmp.le.f32.partialorder %v1168, 0.7853982
    %vm1170 = vcmp.lt.s32.totalorder %v853, 0
    %v1171 = vand.u32 %v853, 2139095040
    %v1172 = vshrl.u32 %v1171, 23
    %v1173 = vsub.s32 %v1172, 127
    %v1174 = vand.u32 2147483647, %v853
    %v1175 = vand.u32 %v1174, 8388607
    %v1176 = vor.u32 %v1175, 8388608
    %v1177 = vsub.s32 0, %v1176
    %v1178 = vadd.s32 %v1173, 1
    %vm1179 = vcmp.gt.s32.totalorder %v1178, 0
    %v1180 = vsel %vm1179, %v1178, 0
    %v1181 = vshrl.u32 %v1180, 5
    %v1182 = vand.u32 %v1180, 31
    %v1183 = vsub.s32 32, %v1182
    %v1184 = vshrl.u32 683565275, %v1183
    %v1185 = vshll.u32 683565275, %v1182
    %v1186 = vshrl.u32 2475754826, %v1183
    %v1187 = vor.u32 %v1185, %v1186
    %v1188 = vshll.u32 2475754826, %v1182
    %v1189 = vshrl.u32 2131351028, %v1183
    %v1190 = vor.u32 %v1188, %v1189
    %v1191 = vshll.u32 2131351028, %v1182
    %v1192 = vshrl.u32 2102212464, %v1183
    %v1193 = vor.u32 %v1191, %v1192
    %v1194 = vshll.u32 2102212464, %v1182
    %v1195 = vshrl.u32 920167782, %v1183
    %v1196 = vor.u32 %v1194, %v1195
    %v1197 = vshll.u32 920167782, %v1182
    %v1198 = vshrl.u32 1326507024, %v1183
    %v1199 = vor.u32 %v1197, %v1198
    %vm1200 = vcmp.lt.s32.totalorder %v1181, 1
    %vm1201 = vcmp.lt.s32.totalorder %v1181, 2
    %vm1202 = vcmp.lt.s32.totalorder %v1181, 3
    %vm1203 = vcmp.lt.s32.totalorder %v1181, 4
    %v1204 = vsel %vm1200, %v1184, %v1187
    %v1205 = vsel %vm1203, %v1193, 2102212464
    %v1206 = vsel %vm1202, %v1190, %v1205
    %v1207 = vsel %vm1201, %v1204, %v1206
    %v1208 = vsel %vm1200, %v1187, %v1190
    %v1209 = vsel %vm1203, %v1196, 920167782
    %v1210 = vsel %vm1202, %v1193, %v1209
    %v1211 = vsel %vm1201, %v1208, %v1210
    %v1212 = vsel %vm1200, %v1190, %v1193
    %v1213 = vsel %vm1203, %v1199, 1326507024
    %v1214 = vsel %vm1202, %v1196, %v1213
    %v1215 = vsel %vm1201, %v1212, %v1214
    %v1216 = vshll.u32 %v1176, 8
    %v1217 = vand.u32 %v1216, 65535
    %v1218 = vshrl.u32 %v1216, 16
    %v1219 = vand.u32 %v1215, 65535
    %v1220 = vshrl.u32 %v1215, 16
    %v1221 = vmul.u32 %v1217, %v1219
    %v1222 = vmul.u32 %v1217, %v1220
    %v1223 = vmul.u32 %v1218, %v1219
    %v1224 = vmul.u32 %v1218, %v1220
    %v1225 = vshll.u32 %v1222, 16
    %v1226 = vshrl.u32 %v1222, 16
    %v1227 = vshll.u32 %v1223, 16
    %v1228 = vshrl.u32 %v1223, 16
    %vm1229 = vc.u32 %v1221, %v1225
    %v1230 = vsel %vm1229, 1, 0
    %v1231 = vadd.s32 %v1221, %v1225
    %v1232 = vadd.s32 %v1224, %v1230
    %vm1233 = vc.u32 %v1231, %v1227
    %v1234 = vsel %vm1233, 1, 0
    %v1235 = vadd.s32 %v1231, %v1227
    %v1236 = vadd.s32 %v1232, %v1234
    %v1237 = vadd.s32 %v1236, %v1226
    %v1238 = vadd.s32 %v1237, %v1228
    %v1239 = vand.u32 %v1216, 65535
    %v1240 = vshrl.u32 %v1216, 16
    %v1241 = vand.u32 %v1211, 65535
    %v1242 = vshrl.u32 %v1211, 16
    %v1243 = vmul.u32 %v1239, %v1241
    %v1244 = vmul.u32 %v1239, %v1242
    %v1245 = vmul.u32 %v1240, %v1241
    %v1246 = vmul.u32 %v1240, %v1242
    %v1247 = vshll.u32 %v1244, 16
    %v1248 = vshrl.u32 %v1244, 16
    %v1249 = vshll.u32 %v1245, 16
    %v1250 = vshrl.u32 %v1245, 16
    %vm1251 = vc.u32 %v1243, %v1247
    %v1252 = vsel %vm1251, 1, 0
    %v1253 = vadd.s32 %v1243, %v1247
    %v1254 = vadd.s32 %v1246, %v1252
    %vm1255 = vc.u32 %v1253, %v1249
    %v1256 = vsel %vm1255, 1, 0
    %v1257 = vadd.s32 %v1253, %v1249
    %v1258 = vadd.s32 %v1254, %v1256
    %v1259 = vadd.s32 %v1258, %v1248
    %v1260 = vadd.s32 %v1259, %v1250
    %v1261 = vmul.u32 %v1216, %v1207
    %v1262 = vadd.s32 %v1238, %v1257
    %vm1263 = vc.u32 %v1238, %v1257
    %v1264 = vadd.s32 %v1260, 1
    %v1265 = vsel %vm1263, %v1264, %v1260
    %v1266 = vadd.s32 %v1261, %v1265
    %v1267 = vadd.s32 %v1266, 536870912
    %v1268 = vshrl.u32 %v1267, 30
    %v1269 = vshll.u32 %v1268, 30
    %v1270 = vsub.s32 %v1266, %v1269
    %vm1271 = vcmp.lt.s32.totalorder %v1270, 0
    %v1272 = vsub.s32 0, %v1270
    %v1273 = vsel %vm1271, %v1272, %v1270
    %v1274 = vclz %v1273
    %v1275 = vsub.s32 %v1274, 2
    %vm1276 = vcmp.gt.s32.totalorder 0, %v1275
    %v1277 = vsel %vm1276, 0, %v1275
    %v1278 = vsub.s32 32, %v1277
    %v1279 = vshll.u32 %v1270, %v1277
    %v1280 = vshrl.u32 %v1262, %v1278
    %v1281 = vor.u32 %v1279, %v1280
    %v1282 = vsub.s32 4294967266, %v1277
    %v1283 = vadd.s32 %v1282, 127
    %v1284 = vshll.u32 %v1283, 23
    %v1285 = vor.u32 4788187, %v1284
    %v1286 = vand.u32 2147483647, %v1285
    %v1288 = vcvt.s32.f32 %v1281
    %v1289 = vmul.f32 %v1288, %v1286
    %v1290 = vxor.u32 %v1289, 2147483648
    %v1291 = vsel %vm1170, %v1290, %v1289
    %v1292 = vsub.s32 4, %v1268
    %v1293 = vsel %vm1170, %v1292, %v1268
    %v1294 = vsel %vm1169, %v853, %v1291
    %v1295 = vsel %vm1169, 0, %v1293
    %v1296 = vmul.f32 %v1294, %v1294
    %v1297 = vmul.f32 %v1296, -0.001358992
    %v1298 = vadd.f32 %v1297, 0.041655596
    %v1299 = vmul.f32 %v1296, %v1298
    %v1300 = vadd.f32 %v1299, -0.4999988
    %v1301 = vmul.f32 %v1296, %v1300
    %v1302 = vadd.f32 1.0, %v1301
    %v1303 = vmul.f32 %v1294, %v1294
    %v1304 = vmul.f32 %v1303, -0.00019511016
    %v1305 = vadd.f32 %v1304, 0.008332121
    %v1306 = vmul.f32 %v1303, %v1305
    %v1307 = vadd.f32 %v1306, -0.16666654
    %v1308 = vmul.f32 %v1303, %v1307
    %v1309 = vadd.f32 %v1308, 1.0
    %v1310 = vmul.f32 %v1309, %v1294
    %vm1311 = vweird.f32 %v853
    %v1312 = vadd.s32 %v1295, 3
    %v1313 = vand.u32 %v1312, 3
    %vm1314 = vcmp.lt.s32.totalorder %v1313, 2
    %vm1315 = vcmp.eq.s32.totalorder %v1313, 0
    %v1316 = vxor.u32 %v1310, 2147483648
    %v1317 = vsel %vm1315, %v1302, %v1316
    %vm1318 = vcmp.eq.s32.totalorder %v1313, 2
    %v1319 = vxor.u32 %v1302, 2147483648
    %v1320 = vsel %vm1318, %v1319, %v1310
    %v1321 = vsel %vm1314, %v1317, %v1320
    %v1322 = vsel %vm1311, nan, %v1321
    %v1323 = vand.u32 2147483647, %v856
    %vm1324 = vcmp.le.f32.partialorder %v1323, 0.7853982
    %vm1325 = vcmp.lt.s32.totalorder %v856, 0
    %v1326 = vand.u32 %v856, 2139095040
    %v1327 = vshrl.u32 %v1326, 23
    %v1328 = vsub.s32 %v1327, 127
    %v1329 = vand.u32 2147483647, %v856
    %v1330 = vand.u32 %v1329, 8388607
    %v1331 = vor.u32 %v1330, 8388608
    %v1332 = vsub.s32 0, %v1331
    %v1333 = vadd.s32 %v1328, 1
    %vm1334 = vcmp.gt.s32.totalorder %v1333, 0
    %v1335 = vsel %vm1334, %v1333, 0
    %v1336 = vshrl.u32 %v1335, 5
    %v1337 = vand.u32 %v1335, 31
    %v1338 = vsub.s32 32, %v1337
    %v1339 = vshrl.u32 683565275, %v1338
    %v1340 = vshll.u32 683565275, %v1337
    %v1341 = vshrl.u32 2475754826, %v1338
    %v1342 = vor.u32 %v1340, %v1341
    %v1343 = vshll.u32 2475754826, %v1337
    %v1344 = vshrl.u32 2131351028, %v1338
    %v1345 = vor.u32 %v1343, %v1344
    %v1346 = vshll.u32 2131351028, %v1337
    %v1347 = vshrl.u32 2102212464, %v1338
    %v1348 = vor.u32 %v1346, %v1347
    %v1349 = vshll.u32 2102212464, %v1337
    %v1350 = vshrl.u32 920167782, %v1338
    %v1351 = vor.u32 %v1349, %v1350
    %v1352 = vshll.u32 920167782, %v1337
    %v1353 = vshrl.u32 1326507024, %v1338
    %v1354 = vor.u32 %v1352, %v1353
    %vm1355 = vcmp.lt.s32.totalorder %v1336, 1
    %vm1356 = vcmp.lt.s32.totalorder %v1336, 2
    %vm1357 = vcmp.lt.s32.totalorder %v1336, 3
    %vm1358 = vcmp.lt.s32.totalorder %v1336, 4
    %v1359 = vsel %vm1355, %v1339, %v1342
    %v1360 = vsel %vm1358, %v1348, 2102212464
    %v1361 = vsel %vm1357, %v1345, %v1360
    %v1362 = vsel %vm1356, %v1359, %v1361
    %v1363 = vsel %vm1355, %v1342, %v1345
    %v1364 = vsel %vm1358, %v1351, 920167782
    %v1365 = vsel %vm1357, %v1348, %v1364
    %v1366 = vsel %vm1356, %v1363, %v1365
    %v1367 = vsel %vm1355, %v1345, %v1348
    %v1368 = vsel %vm1358, %v1354, 1326507024
    %v1369 = vsel %vm1357, %v1351, %v1368
    %v1370 = vsel %vm1356, %v1367, %v1369
    %v1371 = vshll.u32 %v1331, 8
    %v1372 = vand.u32 %v1371, 65535
    %v1373 = vshrl.u32 %v1371, 16
    %v1374 = vand.u32 %v1370, 65535
    %v1375 = vshrl.u32 %v1370, 16
    %v1376 = vmul.u32 %v1372, %v1374
    %v1377 = vmul.u32 %v1372, %v1375
    %v1378 = vmul.u32 %v1373, %v1374
    %v1379 = vmul.u32 %v1373, %v1375
    %v1380 = vshll.u32 %v1377, 16
    %v1381 = vshrl.u32 %v1377, 16
    %v1382 = vshll.u32 %v1378, 16
    %v1383 = vshrl.u32 %v1378, 16
    %vm1384 = vc.u32 %v1376, %v1380
    %v1385 = vsel %vm1384, 1, 0
    %v1386 = vadd.s32 %v1376, %v1380
    %v1387 = vadd.s32 %v1379, %v1385
    %vm1388 = vc.u32 %v1386, %v1382
    %v1389 = vsel %vm1388, 1, 0
    %v1390 = vadd.s32 %v1386, %v1382
    %v1391 = vadd.s32 %v1387, %v1389
    %v1392 = vadd.s32 %v1391, %v1381
    %v1393 = vadd.s32 %v1392, %v1383
    %v1394 = vand.u32 %v1371, 65535
    %v1395 = vshrl.u32 %v1371, 16
    %v1396 = vand.u32 %v1366, 65535
    %v1397 = vshrl.u32 %v1366, 16
    %v1398 = vmul.u32 %v1394, %v1396
    %v1399 = vmul.u32 %v1394, %v1397
    %v1400 = vmul.u32 %v1395, %v1396
    %v1401 = vmul.u32 %v1395, %v1397
    %v1402 = vshll.u32 %v1399, 16
    %v1403 = vshrl.u32 %v1399, 16
    %v1404 = vshll.u32 %v1400, 16
    %v1405 = vshrl.u32 %v1400, 16
    %vm1406 = vc.u32 %v1398, %v1402
    %v1407 = vsel %vm1406, 1, 0
    %v1408 = vadd.s32 %v1398, %v1402
    %v1409 = vadd.s32 %v1401, %v1407
    %vm1410 = vc.u32 %v1408, %v1404
    %v1411 = vsel %vm1410, 1, 0
    %v1412 = vadd.s32 %v1408, %v1404
    %v1413 = vadd.s32 %v1409, %v1411
    %v1414 = vadd.s32 %v1413, %v1403
    %v1415 = vadd.s32 %v1414, %v1405
    %v1416 = vmul.u32 %v1371, %v1362
    %v1417 = vadd.s32 %v1393, %v1412
    %vm1418 = vc.u32 %v1393, %v1412
    %v1419 = vadd.s32 %v1415, 1
    %v1420 = vsel %vm1418, %v1419, %v1415
    %v1421 = vadd.s32 %v1416, %v1420
    %v1422 = vadd.s32 %v1421, 536870912
    %v1423 = vshrl.u32 %v1422, 30
    %v1424 = vshll.u32 %v1423, 30
    %v1425 = vsub.s32 %v1421, %v1424
    %vm1426 = vcmp.lt.s32.totalorder %v1425, 0
    %v1427 = vsub.s32 0, %v1425
    %v1428 = vsel %vm1426, %v1427, %v1425
    %v1429 = vclz %v1428
    %v1430 = vsub.s32 %v1429, 2
    %vm1431 = vcmp.gt.s32.totalorder 0, %v1430
    %v1432 = vsel %vm1431, 0, %v1430
    %v1433 = vsub.s32 32, %v1432
    %v1434 = vshll.u32 %v1425, %v1432
    %v1435 = vshrl.u32 %v1417, %v1433
    %v1436 = vor.u32 %v1434, %v1435
    %v1437 = vsub.s32 4294967266, %v1432
    %v1438 = vadd.s32 %v1437, 127
    %v1439 = vshll.u32 %v1438, 23
    %v1440 = vor.u32 4788187, %v1439
    %v1441 = vand.u32 2147483647, %v1440
    %v1443 = vcvt.s32.f32 %v1436
    %v1444 = vmul.f32 %v1443, %v1441
    %v1445 = vxor.u32 %v1444, 2147483648
    %v1446 = vsel %vm1325, %v1445, %v1444
    %v1447 = vsub.s32 4, %v1423
    %v1448 = vsel %vm1325, %v1447, %v1423
    %v1449 = vsel %vm1324, %v856, %v1446
    %v1450 = vsel %vm1324, 0, %v1448
    %v1451 = vmul.f32 %v1449, %v1449
    %v1452 = vmul.f32 %v1451, -0.001358992
    %v1453 = vadd.f32 %v1452, 0.041655596
    %v1454 = vmul.f32 %v1451, %v1453
    %v1455 = vadd.f32 %v1454, -0.4999988
    %v1456 = vmul.f32 %v1451, %v1455
    %v1457 = vadd.f32 1.0, %v1456
    %v1458 = vmul.f32 %v1449, %v1449
    %v1459 = vmul.f32 %v1458, -0.00019511016
    %v1460 = vadd.f32 %v1459, 0.008332121
    %v1461 = vmul.f32 %v1458, %v1460
    %v1462 = vadd.f32 %v1461, -0.16666654
    %v1463 = vmul.f32 %v1458, %v1462
    %v1464 = vadd.f32 %v1463, 1.0
    %v1465 = vmul.f32 %v1464, %v1449
    %vm1466 = vweird.f32 %v856
    %v1467 = vadd.s32 %v1450, 3
    %v1468 = vand.u32 %v1467, 3
    %vm1469 = vcmp.lt.s32.totalorder %v1468, 2
    %vm1470 = vcmp.eq.s32.totalorder %v1468, 0
    %v1471 = vxor.u32 %v1465, 2147483648
    %v1472 = vsel %vm1470, %v1457, %v1471
    %vm1473 = vcmp.eq.s32.totalorder %v1468, 2
    %v1474 = vxor.u32 %v1457, 2147483648
    %v1475 = vsel %vm1473, %v1474, %v1465
    %v1476 = vsel %vm1469, %v1472, %v1475
    %v1477 = vsel %vm1466, nan, %v1476
    %v1478 = vld [vmem:[%s5] sm:$0xff]
    %v1479 = vld [vmem:[%s5 + $0x8] sm:$0xff]
    %v1480 = vld [vmem:[%s5 + $0x10] sm:$0xff]
    %v1481 = vld [vmem:[%s5 + $0x18] sm:$0xff]
    %v1482 = vld [vmem:[%s6] sm:$0xff]
    %v1483 = vld [vmem:[%s6 + $0x8] sm:$0xff]
    %v1484 = vld [vmem:[%s6 + $0x10] sm:$0xff]
    %v1485 = vld [vmem:[%s6 + $0x18] sm:$0xff]
    %1487 = vset.pattern.permute.xlu0 0
    %1488 = vperm.xlu0 %1487, %v1482
    %v1489 = vpop.permute.xlu0 %1488
    %1492 = vset.pattern.permute.xlu0 0
    %1493 = vperm.xlu0 %1492, %v1483
    %v1494 = vpop.permute.xlu0 %1493
    %1497 = vset.pattern.permute.xlu0 0
    %1498 = vperm.xlu0 %1497, %v1484
    %v1499 = vpop.permute.xlu0 %1498
    %1502 = vset.pattern.permute.xlu0 0
    %1503 = vperm.xlu0 %1502, %v1485
    %v1504 = vpop.permute.xlu0 %1503
    %v1507 = vsel %vm816, %v1478, 0
    %v1510 = vsel %vm816, %v1479, 0
    %v1513 = vsel %vm816, %v1480, 0
    %v1516 = vsel %vm816, %v1481, 0
    %1518 = vmatpush.msra.mxu0 0.0
    %1519 = vmatpush.msra.mxu0 0.0
    %1520 = vmatpush.msra.mxu0 0.0
    %1521 = vmatpush.msra.mxu0 0.0
    %1522 = vmatpush.msra.mxu0 0.0
    %1523 = vmatpush.msra.mxu0 0.0
    %1524 = vmatpush.msra.mxu0 0.0
    %1525 = vmatpush.msra.mxu0 0.0
    %1526 = vmatpush.msra.mxu0 0.0
    %1527 = vmatpush.msra.mxu0 0.0
    %1528 = vmatpush.msra.mxu0 0.0
    %1529 = vmatpush.msra.mxu0 0.0
    %1530 = vmatpush.msra.mxu0 %v1477
    %1531 = vmatpush.msra.mxu0 %v1322
    %1532 = vmatpush.msra.mxu0 %v1167
    %1533 = vmatpush.msra.mxu0 %v1012
    %1534 = vmatmul.f32.gmra.mxu0 %v1507
    %v1535 = vpop.f32.mrf.mxu0
    %v1536 = vadd.f32 %v1489, %v1535
    %1537 = vmatmul.f32.gmra.mxu0 %v1510
    %v1538 = vpop.f32.mrf.mxu0
    %v1539 = vadd.f32 %v1494, %v1538
    %1540 = vmatmul.f32.gmra.mxu0 %v1513
    %v1541 = vpop.f32.mrf.mxu0
    %v1542 = vadd.f32 %v1499, %v1541
    %1543 = vmatmul.f32.gmra.mxu0 %v1516
    %v1544 = vpop.f32.mrf.mxu0
    %v1545 = vadd.f32 %v1504, %v1544
    %1546 = vdwg.mxu0
    %v1547 = vand.u32 2147483647, %v1536
    %vm1548 = vcmp.le.f32.partialorder %v1547, 0.7853982
    %vm1549 = vcmp.lt.s32.totalorder %v1536, 0
    %v1550 = vand.u32 %v1536, 2139095040
    %v1551 = vshrl.u32 %v1550, 23
    %v1552 = vsub.s32 %v1551, 127
    %v1553 = vand.u32 2147483647, %v1536
    %v1554 = vand.u32 %v1553, 8388607
    %v1555 = vor.u32 %v1554, 8388608
    %v1556 = vsub.s32 0, %v1555
    %v1557 = vadd.s32 %v1552, 1
    %vm1558 = vcmp.gt.s32.totalorder %v1557, 0
    %v1559 = vsel %vm1558, %v1557, 0
    %v1560 = vshrl.u32 %v1559, 5
    %v1561 = vand.u32 %v1559, 31
    %v1562 = vsub.s32 32, %v1561
    %v1563 = vshrl.u32 683565275, %v1562
    %v1564 = vshll.u32 683565275, %v1561
    %v1565 = vshrl.u32 2475754826, %v1562
    %v1566 = vor.u32 %v1564, %v1565
    %v1567 = vshll.u32 2475754826, %v1561
    %v1568 = vshrl.u32 2131351028, %v1562
    %v1569 = vor.u32 %v1567, %v1568
    %v1570 = vshll.u32 2131351028, %v1561
    %v1571 = vshrl.u32 2102212464, %v1562
    %v1572 = vor.u32 %v1570, %v1571
    %v1573 = vshll.u32 2102212464, %v1561
    %v1574 = vshrl.u32 920167782, %v1562
    %v1575 = vor.u32 %v1573, %v1574
    %v1576 = vshll.u32 920167782, %v1561
    %v1577 = vshrl.u32 1326507024, %v1562
    %v1578 = vor.u32 %v1576, %v1577
    %vm1579 = vcmp.lt.s32.totalorder %v1560, 1
    %vm1580 = vcmp.lt.s32.totalorder %v1560, 2
    %vm1581 = vcmp.lt.s32.totalorder %v1560, 3
    %vm1582 = vcmp.lt.s32.totalorder %v1560, 4
    %v1583 = vsel %vm1579, %v1563, %v1566
    %v1584 = vsel %vm1582, %v1572, 2102212464
    %v1585 = vsel %vm1581, %v1569, %v1584
    %v1586 = vsel %vm1580, %v1583, %v1585
    %v1587 = vsel %vm1579, %v1566, %v1569
    %v1588 = vsel %vm1582, %v1575, 920167782
    %v1589 = vsel %vm1581, %v1572, %v1588
    %v1590 = vsel %vm1580, %v1587, %v1589
    %v1591 = vsel %vm1579, %v1569, %v1572
    %v1592 = vsel %vm1582, %v1578, 1326507024
    %v1593 = vsel %vm1581, %v1575, %v1592
    %v1594 = vsel %vm1580, %v1591, %v1593
    %v1595 = vshll.u32 %v1555, 8
    %v1596 = vand.u32 %v1595, 65535
    %v1597 = vshrl.u32 %v1595, 16
    %v1598 = vand.u32 %v1594, 65535
    %v1599 = vshrl.u32 %v1594, 16
    %v1600 = vmul.u32 %v1596, %v1598
    %v1601 = vmul.u32 %v1596, %v1599
    %v1602 = vmul.u32 %v1597, %v1598
    %v1603 = vmul.u32 %v1597, %v1599
    %v1604 = vshll.u32 %v1601, 16
    %v1605 = vshrl.u32 %v1601, 16
    %v1606 = vshll.u32 %v1602, 16
    %v1607 = vshrl.u32 %v1602, 16
    %vm1608 = vc.u32 %v1600, %v1604
    %v1609 = vsel %vm1608, 1, 0
    %v1610 = vadd.s32 %v1600, %v1604
    %v1611 = vadd.s32 %v1603, %v1609
    %vm1612 = vc.u32 %v1610, %v1606
    %v1613 = vsel %vm1612, 1, 0
    %v1614 = vadd.s32 %v1610, %v1606
    %v1615 = vadd.s32 %v1611, %v1613
    %v1616 = vadd.s32 %v1615, %v1605
    %v1617 = vadd.s32 %v1616, %v1607
    %v1618 = vand.u32 %v1595, 65535
    %v1619 = vshrl.u32 %v1595, 16
    %v1620 = vand.u32 %v1590, 65535
    %v1621 = vshrl.u32 %v1590, 16
    %v1622 = vmul.u32 %v1618, %v1620
    %v1623 = vmul.u32 %v1618, %v1621
    %v1624 = vmul.u32 %v1619, %v1620
    %v1625 = vmul.u32 %v1619, %v1621
    %v1626 = vshll.u32 %v1623, 16
    %v1627 = vshrl.u32 %v1623, 16
    %v1628 = vshll.u32 %v1624, 16
    %v1629 = vshrl.u32 %v1624, 16
    %vm1630 = vc.u32 %v1622, %v1626
    %v1631 = vsel %vm1630, 1, 0
    %v1632 = vadd.s32 %v1622, %v1626
    %v1633 = vadd.s32 %v1625, %v1631
    %vm1634 = vc.u32 %v1632, %v1628
    %v1635 = vsel %vm1634, 1, 0
    %v1636 = vadd.s32 %v1632, %v1628
    %v1637 = vadd.s32 %v1633, %v1635
    %v1638 = vadd.s32 %v1637, %v1627
    %v1639 = vadd.s32 %v1638, %v1629
    %v1640 = vmul.u32 %v1595, %v1586
    %v1641 = vadd.s32 %v1617, %v1636
    %vm1642 = vc.u32 %v1617, %v1636
    %v1643 = vadd.s32 %v1639, 1
    %v1644 = vsel %vm1642, %v1643, %v1639
    %v1645 = vadd.s32 %v1640, %v1644
    %v1646 = vadd.s32 %v1645, 536870912
    %v1647 = vshrl.u32 %v1646, 30
    %v1648 = vshll.u32 %v1647, 30
    %v1649 = vsub.s32 %v1645, %v1648
    %vm1650 = vcmp.lt.s32.totalorder %v1649, 0
    %v1651 = vsub.s32 0, %v1649
    %v1652 = vsel %vm1650, %v1651, %v1649
    %v1653 = vclz %v1652
    %v1654 = vsub.s32 %v1653, 2
    %vm1655 = vcmp.gt.s32.totalorder 0, %v1654
    %v1656 = vsel %vm1655, 0, %v1654
    %v1657 = vsub.s32 32, %v1656
    %v1658 = vshll.u32 %v1649, %v1656
    %v1659 = vshrl.u32 %v1641, %v1657
    %v1660 = vor.u32 %v1658, %v1659
    %v1661 = vsub.s32 4294967266, %v1656
    %v1662 = vadd.s32 %v1661, 127
    %v1663 = vshll.u32 %v1662, 23
    %v1664 = vor.u32 4788187, %v1663
    %v1665 = vand.u32 2147483647, %v1664
    %v1667 = vcvt.s32.f32 %v1660
    %v1668 = vmul.f32 %v1667, %v1665
    %v1669 = vxor.u32 %v1668, 2147483648
    %v1670 = vsel %vm1549, %v1669, %v1668
    %v1671 = vsub.s32 4, %v1647
    %v1672 = vsel %vm1549, %v1671, %v1647
    %v1673 = vsel %vm1548, %v1536, %v1670
    %v1674 = vsel %vm1548, 0, %v1672
    %v1675 = vmul.f32 %v1673, %v1673
    %v1676 = vmul.f32 %v1675, -0.001358992
    %v1677 = vadd.f32 %v1676, 0.041655596
    %v1678 = vmul.f32 %v1675, %v1677
    %v1679 = vadd.f32 %v1678, -0.4999988
    %v1680 = vmul.f32 %v1675, %v1679
    %v1681 = vadd.f32 1.0, %v1680
    %v1682 = vmul.f32 %v1673, %v1673
    %v1683 = vmul.f32 %v1682, -0.00019511016
    %v1684 = vadd.f32 %v1683, 0.008332121
    %v1685 = vmul.f32 %v1682, %v1684
    %v1686 = vadd.f32 %v1685, -0.16666654
    %v1687 = vmul.f32 %v1682, %v1686
    %v1688 = vadd.f32 %v1687, 1.0
    %v1689 = vmul.f32 %v1688, %v1673
    %vm1690 = vweird.f32 %v1536
    %v1691 = vadd.s32 %v1674, 3
    %v1692 = vand.u32 %v1691, 3
    %vm1693 = vcmp.lt.s32.totalorder %v1692, 2
    %vm1694 = vcmp.eq.s32.totalorder %v1692, 0
    %v1695 = vxor.u32 %v1689, 2147483648
    %v1696 = vsel %vm1694, %v1681, %v1695
    %vm1697 = vcmp.eq.s32.totalorder %v1692, 2
    %v1698 = vxor.u32 %v1681, 2147483648
    %v1699 = vsel %vm1697, %v1698, %v1689
    %v1700 = vsel %vm1693, %v1696, %v1699
    %v1701 = vsel %vm1690, nan, %v1700
    %v1702 = vand.u32 2147483647, %v1539
    %vm1703 = vcmp.le.f32.partialorder %v1702, 0.7853982
    %vm1704 = vcmp.lt.s32.totalorder %v1539, 0
    %v1705 = vand.u32 %v1539, 2139095040
    %v1706 = vshrl.u32 %v1705, 23
    %v1707 = vsub.s32 %v1706, 127
    %v1708 = vand.u32 2147483647, %v1539
    %v1709 = vand.u32 %v1708, 8388607
    %v1710 = vor.u32 %v1709, 8388608
    %v1711 = vsub.s32 0, %v1710
    %v1712 = vadd.s32 %v1707, 1
    %vm1713 = vcmp.gt.s32.totalorder %v1712, 0
    %v1714 = vsel %vm1713, %v1712, 0
    %v1715 = vshrl.u32 %v1714, 5
    %v1716 = vand.u32 %v1714, 31
    %v1717 = vsub.s32 32, %v1716
    %v1718 = vshrl.u32 683565275, %v1717
    %v1719 = vshll.u32 683565275, %v1716
    %v1720 = vshrl.u32 2475754826, %v1717
    %v1721 = vor.u32 %v1719, %v1720
    %v1722 = vshll.u32 2475754826, %v1716
    %v1723 = vshrl.u32 2131351028, %v1717
    %v1724 = vor.u32 %v1722, %v1723
    %v1725 = vshll.u32 2131351028, %v1716
    %v1726 = vshrl.u32 2102212464, %v1717
    %v1727 = vor.u32 %v1725, %v1726
    %v1728 = vshll.u32 2102212464, %v1716
    %v1729 = vshrl.u32 920167782, %v1717
    %v1730 = vor.u32 %v1728, %v1729
    %v1731 = vshll.u32 920167782, %v1716
    %v1732 = vshrl.u32 1326507024, %v1717
    %v1733 = vor.u32 %v1731, %v1732
    %vm1734 = vcmp.lt.s32.totalorder %v1715, 1
    %vm1735 = vcmp.lt.s32.totalorder %v1715, 2
    %vm1736 = vcmp.lt.s32.totalorder %v1715, 3
    %vm1737 = vcmp.lt.s32.totalorder %v1715, 4
    %v1738 = vsel %vm1734, %v1718, %v1721
    %v1739 = vsel %vm1737, %v1727, 2102212464
    %v1740 = vsel %vm1736, %v1724, %v1739
    %v1741 = vsel %vm1735, %v1738, %v1740
    %v1742 = vsel %vm1734, %v1721, %v1724
    %v1743 = vsel %vm1737, %v1730, 920167782
    %v1744 = vsel %vm1736, %v1727, %v1743
    %v1745 = vsel %vm1735, %v1742, %v1744
    %v1746 = vsel %vm1734, %v1724, %v1727
    %v1747 = vsel %vm1737, %v1733, 1326507024
    %v1748 = vsel %vm1736, %v1730, %v1747
    %v1749 = vsel %vm1735, %v1746, %v1748
    %v1750 = vshll.u32 %v1710, 8
    %v1751 = vand.u32 %v1750, 65535
    %v1752 = vshrl.u32 %v1750, 16
    %v1753 = vand.u32 %v1749, 65535
    %v1754 = vshrl.u32 %v1749, 16
    %v1755 = vmul.u32 %v1751, %v1753
    %v1756 = vmul.u32 %v1751, %v1754
    %v1757 = vmul.u32 %v1752, %v1753
    %v1758 = vmul.u32 %v1752, %v1754
    %v1759 = vshll.u32 %v1756, 16
    %v1760 = vshrl.u32 %v1756, 16
    %v1761 = vshll.u32 %v1757, 16
    %v1762 = vshrl.u32 %v1757, 16
    %vm1763 = vc.u32 %v1755, %v1759
    %v1764 = vsel %vm1763, 1, 0
    %v1765 = vadd.s32 %v1755, %v1759
    %v1766 = vadd.s32 %v1758, %v1764
    %vm1767 = vc.u32 %v1765, %v1761
    %v1768 = vsel %vm1767, 1, 0
    %v1769 = vadd.s32 %v1765, %v1761
    %v1770 = vadd.s32 %v1766, %v1768
    %v1771 = vadd.s32 %v1770, %v1760
    %v1772 = vadd.s32 %v1771, %v1762
    %v1773 = vand.u32 %v1750, 65535
    %v1774 = vshrl.u32 %v1750, 16
    %v1775 = vand.u32 %v1745, 65535
    %v1776 = vshrl.u32 %v1745, 16
    %v1777 = vmul.u32 %v1773, %v1775
    %v1778 = vmul.u32 %v1773, %v1776
    %v1779 = vmul.u32 %v1774, %v1775
    %v1780 = vmul.u32 %v1774, %v1776
    %v1781 = vshll.u32 %v1778, 16
    %v1782 = vshrl.u32 %v1778, 16
    %v1783 = vshll.u32 %v1779, 16
    %v1784 = vshrl.u32 %v1779, 16
    %vm1785 = vc.u32 %v1777, %v1781
    %v1786 = vsel %vm1785, 1, 0
    %v1787 = vadd.s32 %v1777, %v1781
    %v1788 = vadd.s32 %v1780, %v1786
    %vm1789 = vc.u32 %v1787, %v1783
    %v1790 = vsel %vm1789, 1, 0
    %v1791 = vadd.s32 %v1787, %v1783
    %v1792 = vadd.s32 %v1788, %v1790
    %v1793 = vadd.s32 %v1792, %v1782
    %v1794 = vadd.s32 %v1793, %v1784
    %v1795 = vmul.u32 %v1750, %v1741
    %v1796 = vadd.s32 %v1772, %v1791
    %vm1797 = vc.u32 %v1772, %v1791
    %v1798 = vadd.s32 %v1794, 1
    %v1799 = vsel %vm1797, %v1798, %v1794
    %v1800 = vadd.s32 %v1795, %v1799
    %v1801 = vadd.s32 %v1800, 536870912
    %v1802 = vshrl.u32 %v1801, 30
    %v1803 = vshll.u32 %v1802, 30
    %v1804 = vsub.s32 %v1800, %v1803
    %vm1805 = vcmp.lt.s32.totalorder %v1804, 0
    %v1806 = vsub.s32 0, %v1804
    %v1807 = vsel %vm1805, %v1806, %v1804
    %v1808 = vclz %v1807
    %v1809 = vsub.s32 %v1808, 2
    %vm1810 = vcmp.gt.s32.totalorder 0, %v1809
    %v1811 = vsel %vm1810, 0, %v1809
    %v1812 = vsub.s32 32, %v1811
    %v1813 = vshll.u32 %v1804, %v1811
    %v1814 = vshrl.u32 %v1796, %v1812
    %v1815 = vor.u32 %v1813, %v1814
    %v1816 = vsub.s32 4294967266, %v1811
    %v1817 = vadd.s32 %v1816, 127
    %v1818 = vshll.u32 %v1817, 23
    %v1819 = vor.u32 4788187, %v1818
    %v1820 = vand.u32 2147483647, %v1819
    %v1822 = vcvt.s32.f32 %v1815
    %v1823 = vmul.f32 %v1822, %v1820
    %v1824 = vxor.u32 %v1823, 2147483648
    %v1825 = vsel %vm1704, %v1824, %v1823
    %v1826 = vsub.s32 4, %v1802
    %v1827 = vsel %vm1704, %v1826, %v1802
    %v1828 = vsel %vm1703, %v1539, %v1825
    %v1829 = vsel %vm1703, 0, %v1827
    %v1830 = vmul.f32 %v1828, %v1828
    %v1831 = vmul.f32 %v1830, -0.001358992
    %v1832 = vadd.f32 %v1831, 0.041655596
    %v1833 = vmul.f32 %v1830, %v1832
    %v1834 = vadd.f32 %v1833, -0.4999988
    %v1835 = vmul.f32 %v1830, %v1834
    %v1836 = vadd.f32 1.0, %v1835
    %v1837 = vmul.f32 %v1828, %v1828
    %v1838 = vmul.f32 %v1837, -0.00019511016
    %v1839 = vadd.f32 %v1838, 0.008332121
    %v1840 = vmul.f32 %v1837, %v1839
    %v1841 = vadd.f32 %v1840, -0.16666654
    %v1842 = vmul.f32 %v1837, %v1841
    %v1843 = vadd.f32 %v1842, 1.0
    %v1844 = vmul.f32 %v1843, %v1828
    %vm1845 = vweird.f32 %v1539
    %v1846 = vadd.s32 %v1829, 3
    %v1847 = vand.u32 %v1846, 3
    %vm1848 = vcmp.lt.s32.totalorder %v1847, 2
    %vm1849 = vcmp.eq.s32.totalorder %v1847, 0
    %v1850 = vxor.u32 %v1844, 2147483648
    %v1851 = vsel %vm1849, %v1836, %v1850
    %vm1852 = vcmp.eq.s32.totalorder %v1847, 2
    %v1853 = vxor.u32 %v1836, 2147483648
    %v1854 = vsel %vm1852, %v1853, %v1844
    %v1855 = vsel %vm1848, %v1851, %v1854
    %v1856 = vsel %vm1845, nan, %v1855
    %v1857 = vand.u32 2147483647, %v1542
    %vm1858 = vcmp.le.f32.partialorder %v1857, 0.7853982
    %vm1859 = vcmp.lt.s32.totalorder %v1542, 0
    %v1860 = vand.u32 %v1542, 2139095040
    %v1861 = vshrl.u32 %v1860, 23
    %v1862 = vsub.s32 %v1861, 127
    %v1863 = vand.u32 2147483647, %v1542
    %v1864 = vand.u32 %v1863, 8388607
    %v1865 = vor.u32 %v1864, 8388608
    %v1866 = vsub.s32 0, %v1865
    %v1867 = vadd.s32 %v1862, 1
    %vm1868 = vcmp.gt.s32.totalorder %v1867, 0
    %v1869 = vsel %vm1868, %v1867, 0
    %v1870 = vshrl.u32 %v1869, 5
    %v1871 = vand.u32 %v1869, 31
    %v1872 = vsub.s32 32, %v1871
    %v1873 = vshrl.u32 683565275, %v1872
    %v1874 = vshll.u32 683565275, %v1871
    %v1875 = vshrl.u32 2475754826, %v1872
    %v1876 = vor.u32 %v1874, %v1875
    %v1877 = vshll.u32 2475754826, %v1871
    %v1878 = vshrl.u32 2131351028, %v1872
    %v1879 = vor.u32 %v1877, %v1878
    %v1880 = vshll.u32 2131351028, %v1871
    %v1881 = vshrl.u32 2102212464, %v1872
    %v1882 = vor.u32 %v1880, %v1881
    %v1883 = vshll.u32 2102212464, %v1871
    %v1884 = vshrl.u32 920167782, %v1872
    %v1885 = vor.u32 %v1883, %v1884
    %v1886 = vshll.u32 920167782, %v1871
    %v1887 = vshrl.u32 1326507024, %v1872
    %v1888 = vor.u32 %v1886, %v1887
    %vm1889 = vcmp.lt.s32.totalorder %v1870, 1
    %vm1890 = vcmp.lt.s32.totalorder %v1870, 2
    %vm1891 = vcmp.lt.s32.totalorder %v1870, 3
    %vm1892 = vcmp.lt.s32.totalorder %v1870, 4
    %v1893 = vsel %vm1889, %v1873, %v1876
    %v1894 = vsel %vm1892, %v1882, 2102212464
    %v1895 = vsel %vm1891, %v1879, %v1894
    %v1896 = vsel %vm1890, %v1893, %v1895
    %v1897 = vsel %vm1889, %v1876, %v1879
    %v1898 = vsel %vm1892, %v1885, 920167782
    %v1899 = vsel %vm1891, %v1882, %v1898
    %v1900 = vsel %vm1890, %v1897, %v1899
    %v1901 = vsel %vm1889, %v1879, %v1882
    %v1902 = vsel %vm1892, %v1888, 1326507024
    %v1903 = vsel %vm1891, %v1885, %v1902
    %v1904 = vsel %vm1890, %v1901, %v1903
    %v1905 = vshll.u32 %v1865, 8
    %v1906 = vand.u32 %v1905, 65535
    %v1907 = vshrl.u32 %v1905, 16
    %v1908 = vand.u32 %v1904, 65535
    %v1909 = vshrl.u32 %v1904, 16
    %v1910 = vmul.u32 %v1906, %v1908
    %v1911 = vmul.u32 %v1906, %v1909
    %v1912 = vmul.u32 %v1907, %v1908
    %v1913 = vmul.u32 %v1907, %v1909
    %v1914 = vshll.u32 %v1911, 16
    %v1915 = vshrl.u32 %v1911, 16
    %v1916 = vshll.u32 %v1912, 16
    %v1917 = vshrl.u32 %v1912, 16
    %vm1918 = vc.u32 %v1910, %v1914
    %v1919 = vsel %vm1918, 1, 0
    %v1920 = vadd.s32 %v1910, %v1914
    %v1921 = vadd.s32 %v1913, %v1919
    %vm1922 = vc.u32 %v1920, %v1916
    %v1923 = vsel %vm1922, 1, 0
    %v1924 = vadd.s32 %v1920, %v1916
    %v1925 = vadd.s32 %v1921, %v1923
    %v1926 = vadd.s32 %v1925, %v1915
    %v1927 = vadd.s32 %v1926, %v1917
    %v1928 = vand.u32 %v1905, 65535
    %v1929 = vshrl.u32 %v1905, 16
    %v1930 = vand.u32 %v1900, 65535
    %v1931 = vshrl.u32 %v1900, 16
    %v1932 = vmul.u32 %v1928, %v1930
    %v1933 = vmul.u32 %v1928, %v1931
    %v1934 = vmul.u32 %v1929, %v1930
    %v1935 = vmul.u32 %v1929, %v1931
    %v1936 = vshll.u32 %v1933, 16
    %v1937 = vshrl.u32 %v1933, 16
    %v1938 = vshll.u32 %v1934, 16
    %v1939 = vshrl.u32 %v1934, 16
    %vm1940 = vc.u32 %v1932, %v1936
    %v1941 = vsel %vm1940, 1, 0
    %v1942 = vadd.s32 %v1932, %v1936
    %v1943 = vadd.s32 %v1935, %v1941
    %vm1944 = vc.u32 %v1942, %v1938
    %v1945 = vsel %vm1944, 1, 0
    %v1946 = vadd.s32 %v1942, %v1938
    %v1947 = vadd.s32 %v1943, %v1945
    %v1948 = vadd.s32 %v1947, %v1937
    %v1949 = vadd.s32 %v1948, %v1939
    %v1950 = vmul.u32 %v1905, %v1896
    %v1951 = vadd.s32 %v1927, %v1946
    %vm1952 = vc.u32 %v1927, %v1946
    %v1953 = vadd.s32 %v1949, 1
    %v1954 = vsel %vm1952, %v1953, %v1949
    %v1955 = vadd.s32 %v1950, %v1954
    %v1956 = vadd.s32 %v1955, 536870912
    %v1957 = vshrl.u32 %v1956, 30
    %v1958 = vshll.u32 %v1957, 30
    %v1959 = vsub.s32 %v1955, %v1958
    %vm1960 = vcmp.lt.s32.totalorder %v1959, 0
    %v1961 = vsub.s32 0, %v1959
    %v1962 = vsel %vm1960, %v1961, %v1959
    %v1963 = vclz %v1962
    %v1964 = vsub.s32 %v1963, 2
    %vm1965 = vcmp.gt.s32.totalorder 0, %v1964
    %v1966 = vsel %vm1965, 0, %v1964
    %v1967 = vsub.s32 32, %v1966
    %v1968 = vshll.u32 %v1959, %v1966
    %v1969 = vshrl.u32 %v1951, %v1967
    %v1970 = vor.u32 %v1968, %v1969
    %v1971 = vsub.s32 4294967266, %v1966
    %v1972 = vadd.s32 %v1971, 127
    %v1973 = vshll.u32 %v1972, 23
    %v1974 = vor.u32 4788187, %v1973
    %v1975 = vand.u32 2147483647, %v1974
    %v1977 = vcvt.s32.f32 %v1970
    %v1978 = vmul.f32 %v1977, %v1975
    %v1979 = vxor.u32 %v1978, 2147483648
    %v1980 = vsel %vm1859, %v1979, %v1978
    %v1981 = vsub.s32 4, %v1957
    %v1982 = vsel %vm1859, %v1981, %v1957
    %v1983 = vsel %vm1858, %v1542, %v1980
    %v1984 = vsel %vm1858, 0, %v1982
    %v1985 = vmul.f32 %v1983, %v1983
    %v1986 = vmul.f32 %v1985, -0.001358992
    %v1987 = vadd.f32 %v1986, 0.041655596
    %v1988 = vmul.f32 %v1985, %v1987
    %v1989 = vadd.f32 %v1988, -0.4999988
    %v1990 = vmul.f32 %v1985, %v1989
    %v1991 = vadd.f32 1.0, %v1990
    %v1992 = vmul.f32 %v1983, %v1983
    %v1993 = vmul.f32 %v1992, -0.00019511016
    %v1994 = vadd.f32 %v1993, 0.008332121
    %v1995 = vmul.f32 %v1992, %v1994
    %v1996 = vadd.f32 %v1995, -0.16666654
    %v1997 = vmul.f32 %v1992, %v1996
    %v1998 = vadd.f32 %v1997, 1.0
    %v1999 = vmul.f32 %v1998, %v1983
    %vm2000 = vweird.f32 %v1542
    %v2001 = vadd.s32 %v1984, 3
    %v2002 = vand.u32 %v2001, 3
    %vm2003 = vcmp.lt.s32.totalorder %v2002, 2
    %vm2004 = vcmp.eq.s32.totalorder %v2002, 0
    %v2005 = vxor.u32 %v1999, 2147483648
    %v2006 = vsel %vm2004, %v1991, %v2005
    %vm2007 = vcmp.eq.s32.totalorder %v2002, 2
    %v2008 = vxor.u32 %v1991, 2147483648
    %v2009 = vsel %vm2007, %v2008, %v1999
    %v2010 = vsel %vm2003, %v2006, %v2009
    %v2011 = vsel %vm2000, nan, %v2010
    %v2012 = vand.u32 2147483647, %v1545
    %vm2013 = vcmp.le.f32.partialorder %v2012, 0.7853982
    %vm2014 = vcmp.lt.s32.totalorder %v1545, 0
    %v2015 = vand.u32 %v1545, 2139095040
    %v2016 = vshrl.u32 %v2015, 23
    %v2017 = vsub.s32 %v2016, 127
    %v2018 = vand.u32 2147483647, %v1545
    %v2019 = vand.u32 %v2018, 8388607
    %v2020 = vor.u32 %v2019, 8388608
    %v2021 = vsub.s32 0, %v2020
    %v2022 = vadd.s32 %v2017, 1
    %vm2023 = vcmp.gt.s32.totalorder %v2022, 0
    %v2024 = vsel %vm2023, %v2022, 0
    %v2025 = vshrl.u32 %v2024, 5
    %v2026 = vand.u32 %v2024, 31
    %v2027 = vsub.s32 32, %v2026
    %v2028 = vshrl.u32 683565275, %v2027
    %v2029 = vshll.u32 683565275, %v2026
    %v2030 = vshrl.u32 2475754826, %v2027
    %v2031 = vor.u32 %v2029, %v2030
    %v2032 = vshll.u32 2475754826, %v2026
    %v2033 = vshrl.u32 2131351028, %v2027
    %v2034 = vor.u32 %v2032, %v2033
    %v2035 = vshll.u32 2131351028, %v2026
    %v2036 = vshrl.u32 2102212464, %v2027
    %v2037 = vor.u32 %v2035, %v2036
    %v2038 = vshll.u32 2102212464, %v2026
    %v2039 = vshrl.u32 920167782, %v2027
    %v2040 = vor.u32 %v2038, %v2039
    %v2041 = vshll.u32 920167782, %v2026
    %v2042 = vshrl.u32 1326507024, %v2027
    %v2043 = vor.u32 %v2041, %v2042
    %vm2044 = vcmp.lt.s32.totalorder %v2025, 1
    %vm2045 = vcmp.lt.s32.totalorder %v2025, 2
    %vm2046 = vcmp.lt.s32.totalorder %v2025, 3
    %vm2047 = vcmp.lt.s32.totalorder %v2025, 4
    %v2048 = vsel %vm2044, %v2028, %v2031
    %v2049 = vsel %vm2047, %v2037, 2102212464
    %v2050 = vsel %vm2046, %v2034, %v2049
    %v2051 = vsel %vm2045, %v2048, %v2050
    %v2052 = vsel %vm2044, %v2031, %v2034
    %v2053 = vsel %vm2047, %v2040, 920167782
    %v2054 = vsel %vm2046, %v2037, %v2053
    %v2055 = vsel %vm2045, %v2052, %v2054
    %v2056 = vsel %vm2044, %v2034, %v2037
    %v2057 = vsel %vm2047, %v2043, 1326507024
    %v2058 = vsel %vm2046, %v2040, %v2057
    %v2059 = vsel %vm2045, %v2056, %v2058
    %v2060 = vshll.u32 %v2020, 8
    %v2061 = vand.u32 %v2060, 65535
    %v2062 = vshrl.u32 %v2060, 16
    %v2063 = vand.u32 %v2059, 65535
    %v2064 = vshrl.u32 %v2059, 16
    %v2065 = vmul.u32 %v2061, %v2063
    %v2066 = vmul.u32 %v2061, %v2064
    %v2067 = vmul.u32 %v2062, %v2063
    %v2068 = vmul.u32 %v2062, %v2064
    %v2069 = vshll.u32 %v2066, 16
    %v2070 = vshrl.u32 %v2066, 16
    %v2071 = vshll.u32 %v2067, 16
    %v2072 = vshrl.u32 %v2067, 16
    %vm2073 = vc.u32 %v2065, %v2069
    %v2074 = vsel %vm2073, 1, 0
    %v2075 = vadd.s32 %v2065, %v2069
    %v2076 = vadd.s32 %v2068, %v2074
    %vm2077 = vc.u32 %v2075, %v2071
    %v2078 = vsel %vm2077, 1, 0
    %v2079 = vadd.s32 %v2075, %v2071
    %v2080 = vadd.s32 %v2076, %v2078
    %v2081 = vadd.s32 %v2080, %v2070
    %v2082 = vadd.s32 %v2081, %v2072
    %v2083 = vand.u32 %v2060, 65535
    %v2084 = vshrl.u32 %v2060, 16
    %v2085 = vand.u32 %v2055, 65535
    %v2086 = vshrl.u32 %v2055, 16
    %v2087 = vmul.u32 %v2083, %v2085
    %v2088 = vmul.u32 %v2083, %v2086
    %v2089 = vmul.u32 %v2084, %v2085
    %v2090 = vmul.u32 %v2084, %v2086
    %v2091 = vshll.u32 %v2088, 16
    %v2092 = vshrl.u32 %v2088, 16
    %v2093 = vshll.u32 %v2089, 16
    %v2094 = vshrl.u32 %v2089, 16
    %vm2095 = vc.u32 %v2087, %v2091
    %v2096 = vsel %vm2095, 1, 0
    %v2097 = vadd.s32 %v2087, %v2091
    %v2098 = vadd.s32 %v2090, %v2096
    %vm2099 = vc.u32 %v2097, %v2093
    %v2100 = vsel %vm2099, 1, 0
    %v2101 = vadd.s32 %v2097, %v2093
    %v2102 = vadd.s32 %v2098, %v2100
    %v2103 = vadd.s32 %v2102, %v2092
    %v2104 = vadd.s32 %v2103, %v2094
    %v2105 = vmul.u32 %v2060, %v2051
    %v2106 = vadd.s32 %v2082, %v2101
    %vm2107 = vc.u32 %v2082, %v2101
    %v2108 = vadd.s32 %v2104, 1
    %v2109 = vsel %vm2107, %v2108, %v2104
    %v2110 = vadd.s32 %v2105, %v2109
    %v2111 = vadd.s32 %v2110, 536870912
    %v2112 = vshrl.u32 %v2111, 30
    %v2113 = vshll.u32 %v2112, 30
    %v2114 = vsub.s32 %v2110, %v2113
    %vm2115 = vcmp.lt.s32.totalorder %v2114, 0
    %v2116 = vsub.s32 0, %v2114
    %v2117 = vsel %vm2115, %v2116, %v2114
    %v2118 = vclz %v2117
    %v2119 = vsub.s32 %v2118, 2
    %vm2120 = vcmp.gt.s32.totalorder 0, %v2119
    %v2121 = vsel %vm2120, 0, %v2119
    %v2122 = vsub.s32 32, %v2121
    %v2123 = vshll.u32 %v2114, %v2121
    %v2124 = vshrl.u32 %v2106, %v2122
    %v2125 = vor.u32 %v2123, %v2124
    %v2126 = vsub.s32 4294967266, %v2121
    %v2127 = vadd.s32 %v2126, 127
    %v2128 = vshll.u32 %v2127, 23
    %v2129 = vor.u32 4788187, %v2128
    %v2130 = vand.u32 2147483647, %v2129
    %v2132 = vcvt.s32.f32 %v2125
    %v2133 = vmul.f32 %v2132, %v2130
    %v2134 = vxor.u32 %v2133, 2147483648
    %v2135 = vsel %vm2014, %v2134, %v2133
    %v2136 = vsub.s32 4, %v2112
    %v2137 = vsel %vm2014, %v2136, %v2112
    %v2138 = vsel %vm2013, %v1545, %v2135
    %v2139 = vsel %vm2013, 0, %v2137
    %v2140 = vmul.f32 %v2138, %v2138
    %v2141 = vmul.f32 %v2140, -0.001358992
    %v2142 = vadd.f32 %v2141, 0.041655596
    %v2143 = vmul.f32 %v2140, %v2142
    %v2144 = vadd.f32 %v2143, -0.4999988
    %v2145 = vmul.f32 %v2140, %v2144
    %v2146 = vadd.f32 1.0, %v2145
    %v2147 = vmul.f32 %v2138, %v2138
    %v2148 = vmul.f32 %v2147, -0.00019511016
    %v2149 = vadd.f32 %v2148, 0.008332121
    %v2150 = vmul.f32 %v2147, %v2149
    %v2151 = vadd.f32 %v2150, -0.16666654
    %v2152 = vmul.f32 %v2147, %v2151
    %v2153 = vadd.f32 %v2152, 1.0
    %v2154 = vmul.f32 %v2153, %v2138
    %vm2155 = vweird.f32 %v1545
    %v2156 = vadd.s32 %v2139, 3
    %v2157 = vand.u32 %v2156, 3
    %vm2158 = vcmp.lt.s32.totalorder %v2157, 2
    %vm2159 = vcmp.eq.s32.totalorder %v2157, 0
    %v2160 = vxor.u32 %v2154, 2147483648
    %v2161 = vsel %vm2159, %v2146, %v2160
    %vm2162 = vcmp.eq.s32.totalorder %v2157, 2
    %v2163 = vxor.u32 %v2146, 2147483648
    %v2164 = vsel %vm2162, %v2163, %v2154
    %v2165 = vsel %vm2158, %v2161, %v2164
    %v2166 = vsel %vm2155, nan, %v2165
    %v2167 = vld [vmem:[%s7] sm:$0x1]
    %s2168 = sld [smem:[#allocation2]]
    %v2169 = vstv %s2168
    %v2171 = vsel %vm816, %v2167, 0
    %2173 = vmatpush.msra.mxu0 0.0
    %2174 = vmatpush.msra.mxu0 0.0
    %2175 = vmatpush.msra.mxu0 0.0
    %2176 = vmatpush.msra.mxu0 0.0
    %2177 = vmatpush.msra.mxu0 0.0
    %2178 = vmatpush.msra.mxu0 0.0
    %2179 = vmatpush.msra.mxu0 0.0
    %2180 = vmatpush.msra.mxu0 0.0
    %2181 = vmatpush.msra.mxu0 0.0
    %2182 = vmatpush.msra.mxu0 0.0
    %2183 = vmatpush.msra.mxu0 0.0
    %2184 = vmatpush.msra.mxu0 0.0
    %2185 = vmatpush.msra.mxu0 %v2166
    %2186 = vmatpush.msra.mxu0 %v2011
    %2187 = vmatpush.msra.mxu0 %v1856
    %2188 = vmatpush.msra.mxu0 %v1701
    %2189 = vmatmul.f32.gmra.mxu0 %v2171
    %v2190 = vpop.f32.mrf.mxu0
    %v2191 = vadd.f32 %v2169, %v2190
    %2192 = vdwg.mxu0
    %2193 = vst [vmem:[#allocation3] sm:$0x1] %v2191
    // Predicated region
    $region38: #{tpu_custom_call.1} parent=1 // pred_check
      _
    $region39: #{tpu_custom_call.1} parent=1 // pred_check_branch
      %2195 = sbr.rel (0) target = $region41
    $region40: #{tpu_custom_call.1} parent=1 // pred_region
      %2197 = vsyncadd [#allocation4], 0
      %s2199 = sshll.u32 [#allocation3], 4
      %s2200 = int_to_ptr.vmem [resolvable:$true] %s2199
      %s2201 = sshll.u32 %s9, 4
      %s2202 = int_to_ptr.hbm [resolvable:$true] %s2201
      %2204 = dma.vmem_to_hbm [thread:$0]  %s2200, 16, %s2202, [#allocation4]
    $region41: #{tpu_custom_call.1} parent=1 // pred_fallthru
      _
    // Predicated region
    $region42: #{tpu_custom_call.1} parent=1 // pred_check
      _
    $region43: #{tpu_custom_call.1} parent=1 // pred_check_branch
      %2206 = sbr.rel (0) target = $region45
    $region44: #{tpu_custom_call.1} parent=1 // pred_region
      %2208 = dma.done [#allocation4], 16
    $region45: #{tpu_custom_call.1} parent=1 // pred_fallthru
      _
    %2209 = vsyncpa [#allocation4], 1

</llo_original>
